<compile_context>
chip_gen: v7x
topology: tpu7x:2x2x1
jax: 0.10.0
libtpu: 0.0.40
codegen_flags: <defaults>
</compile_context>

<pallas_src>
import math
import functools

import jax
import jax.numpy as jnp
from jax.experimental import pallas as pl
from jax.experimental.pallas import tpu as pltpu


def mhsa_kernel(x_ref, pos_ref, gamma_ref, beta_ref,
                wqkv_ref, bqkv_ref, wo_ref, bo_ref,
                o_ref, q_buf, attn_buf, *, emb_dim, num_heads, q_tile):
    """One grid step = Bt batch elements, full (S, Ep) sequence each.

    x_ref/o_ref: (Bt, S, Ep) with Ep = emb_dim padded to a multiple of 128.
    q_buf:  VMEM (Bt*H, S, D) bf16  -- head-layout queries (sliced per q tile)
    attn_buf: VMEM (Bt, S, E) bf16 -- per-tile attention context, consumed by out-proj
    """
    Bt, S, Ep = x_ref.shape
    E = emb_dim
    H = num_heads
    D = E // H
    Tq = q_tile
    n_q = S // Tq

    # ---- LayerNorm over the real E columns (pad cols of x / gamma / beta are 0) ----
    x = x_ref[...].astype(jnp.float32)                           # (Bt, S, Ep)
    inv_e = 1.0 / E
    mean = jnp.sum(x, axis=-1, keepdims=True) * inv_e
    var = jnp.sum(x * x, axis=-1, keepdims=True) * inv_e - mean * mean
    xn = (x - mean) * jax.lax.rsqrt(var + 1e-5) * gamma_ref[0] + beta_ref[0]

    # ---- add positional embedding, flatten batch into the matmul M dim ----
    xp = (xn + pos_ref[...]).astype(jnp.bfloat16)                # (Bt, S, Ep) bf16
    xp = xp.reshape(Bt * S, Ep)

    # ---- fused QKV projection: bf16 operands, f32 accumulation.
    #      1/sqrt(D) already folded into the Q columns / Q bias on the host. ----
    qkv = jnp.dot(xp, wqkv_ref[...],
                  preferred_element_type=jnp.float32) + bqkv_ref[...]   # (Bt*S, 3E)

    def to_heads(t):
        # (Bt*S, E) f32 -> (Bt*H, S, D) bf16; cast BEFORE the relayout transpose.
        t = t.astype(jnp.bfloat16).reshape(Bt, S, H, D)
        return jnp.transpose(t, (0, 2, 1, 3)).reshape(Bt * H, S, D)

    q_buf[...] = to_heads(qkv[:, 0:E])
    kh = to_heads(qkv[:, E:2 * E])
    vh = to_heads(qkv[:, 2 * E:3 * E])

    # ---- attention, tiled over the query axis: only (Bt*H, Tq, S) scores live ----
    def q_step(qi, carry):
        start = pl.multiple_of(qi * Tq, Tq)
        qt = q_buf[:, pl.ds(start, Tq), :]                       # (Bt*H, Tq, D) bf16
        s = jnp.einsum("bqd,bkd->bqk", qt, kh,
                       preferred_element_type=jnp.float32)       # (Bt*H, Tq, S) f32
        s = s - jnp.max(s, axis=-1, keepdims=True)
        p = jnp.exp(s)
        l = jnp.sum(p, axis=-1, keepdims=True)                   # (Bt*H, Tq, 1)
        ctx = jnp.einsum("bqk,bkd->bqd", p.astype(jnp.bfloat16), vh,
                         preferred_element_type=jnp.float32)     # (Bt*H, Tq, D) f32
        # Deferred softmax normalization: scale the small (.., D) ctx, not (.., S) p.
        ctx = ctx * pl.reciprocal(l, approx=True)
        ctx = ctx.astype(jnp.bfloat16).reshape(Bt, H, Tq, D)     # cast before transpose
        ctx = jnp.transpose(ctx, (0, 2, 1, 3)).reshape(Bt, Tq, H * D)
        attn_buf[:, pl.ds(start, Tq), :] = ctx
        return carry

    jax.lax.fori_loop(0, n_q, q_step, 0, unroll=n_q <= 4)

    # ---- output projection + residual (re-read x_ref, keep nothing live across loop) ----
    attn = attn_buf[...].reshape(Bt * S, E)                      # bf16
    out = jnp.dot(attn, wo_ref[...],
                  preferred_element_type=jnp.float32) + bo_ref[...]     # (Bt*S, Ep)
    out = out.reshape(Bt, S, Ep) + x_ref[...].astype(jnp.float32)
    o_ref[...] = out.astype(o_ref.dtype)


def get_positional_matrix(max_rel_pos, emb_dim):
    """Same construction as ConformerMHSA.get_positional_matrix (without batch dim)."""
    n = 2 * max_rel_pos + 1
    pos = jnp.arange(0, n, dtype=jnp.float32)[:, None]                   # (n, 1)
    divisor = jnp.exp(jnp.arange(0, emb_dim, 2, dtype=jnp.float32)
                      * (-math.log(10000.0) / emb_dim))                  # (E/2,)
    matrix = jnp.zeros((n, emb_dim), dtype=jnp.float32)
    matrix = matrix.at[:, 0::2].set(jnp.sin(pos * divisor))
    matrix = matrix.at[:, 1::2].set(jnp.cos(pos * divisor))
    return matrix                                                        # (n, E)


def _choose_bt(B, S):
    """Smallest divisor of B with Bt*S >= 256 (MXU M-dim fill); else the whole batch."""
    for cand in range(1, B + 1):
        if B % cand == 0 and cand * S >= 256:
            return cand
    return B


def _choose_tq(S, H, Bt, score_budget_bytes=8 * 1024 * 1024):
    """Largest divisor of S keeping the f32 (Bt*H, Tq, S) score tile under ~8 MiB."""
    cap = max(1, score_budget_bytes // (Bt * H * S * 4))
    best = 1
    for d in range(1, S + 1):
        if S % d == 0 and d <= cap:
            best = d
    return best


def _vmem_limit_bytes():
    """~75% of physical VMEM: ~48 MiB on v7x (64 MiB), 96 MiB on v5e/v6e (128 MiB)."""
    try:
        cap = int(pltpu.get_tpu_info().vmem_capacity_bytes)
    except Exception:
        cap = 64 * 1024 * 1024        # conservative fallback (v7x physical size)
    return max(32 * 1024 * 1024, min(cap * 3 // 4, 96 * 1024 * 1024))


def conformer_mhsa(x, params, *, num_heads):
    """x: (B, S, E) float32.  params: dict of JAX arrays (see init_params)."""
    B, S, E = x.shape
    assert E % num_heads == 0
    max_pos = params["pos_matrix"].shape[0]
    assert S <= max_pos, f"seq_len {S} exceeds positional matrix rows {max_pos}"

    Ep = ((E + 127) // 128) * 128       # lane-dense padded embedding dim
    pad = Ep - E
    scale = 1.0 / math.sqrt(E // num_heads)

    Bt = _choose_bt(B, S)
    Tq = _choose_tq(S, num_heads, Bt)

    def pad_last(a):
        if pad == 0:
            return a
        return jnp.pad(a, [(0, 0)] * (a.ndim - 1) + [(0, pad)])

    x_p = pad_last(x)                                                    # (B, S, Ep)
    pos_p = pad_last(params["pos_matrix"][:S, :]).astype(jnp.float32)    # (S, Ep)
    gamma_p = pad_last(params["ln_gamma"].reshape(1, E)).astype(jnp.float32)
    beta_p = pad_last(params["ln_beta"].reshape(1, E)).astype(jnp.float32)

    # Fused QKV weight: x @ W^T layout, columns [Q|K|V], 1/sqrt(D) folded into Q,
    # contraction dim zero-padded to Ep, shipped as bf16.
    w_in = params["in_proj_weight"]                                      # (3E, E)
    w_qkv = jnp.concatenate([w_in[0:E].T * scale,
                             w_in[E:2 * E].T,
                             w_in[2 * E:3 * E].T], axis=1)               # (E, 3E)
    w_qkv = jnp.pad(w_qkv, ((0, pad), (0, 0))).astype(jnp.bfloat16)      # (Ep, 3E)
    b_in = params["in_proj_bias"]
    b_qkv = jnp.concatenate([b_in[0:E] * scale, b_in[E:]]
                            ).reshape(1, 3 * E).astype(jnp.float32)      # (1, 3E)

    w_out = jnp.pad(params["out_proj_weight"].T,
                    ((0, 0), (0, pad))).astype(jnp.bfloat16)             # (E, Ep)
    b_out = pad_last(params["out_proj_bias"].reshape(1, E)).astype(jnp.float32)

    kernel = functools.partial(mhsa_kernel, emb_dim=E, num_heads=num_heads, q_tile=Tq)

    out_p = pl.pallas_call(
        kernel,
        out_shape=jax.ShapeDtypeStruct((B, S, Ep), x.dtype),
        grid_spec=pltpu.PrefetchScalarGridSpec(
            num_scalar_prefetch=0,
            grid=(B // Bt,),
            in_specs=[
                pl.BlockSpec((Bt, S, Ep), lambda b: (b, 0, 0)),      # x (padded)
                pl.BlockSpec((S, Ep), lambda b: (0, 0)),             # pos (sliced+padded)
                pl.BlockSpec((1, Ep), lambda b: (0, 0)),             # gamma
                pl.BlockSpec((1, Ep), lambda b: (0, 0)),             # beta
                pl.BlockSpec((Ep, 3 * E), lambda b: (0, 0)),         # fused W_qkv (bf16)
                pl.BlockSpec((1, 3 * E), lambda b: (0, 0)),          # fused b_qkv
                pl.BlockSpec((E, Ep), lambda b: (0, 0)),             # W_out^T (bf16)
                pl.BlockSpec((1, Ep), lambda b: (0, 0)),             # b_out
            ],
            out_specs=pl.BlockSpec((Bt, S, Ep), lambda b: (b, 0, 0)),
            scratch_shapes=[
                pltpu.VMEM((Bt * num_heads, S, E // num_heads), jnp.bfloat16),  # q heads
                pltpu.VMEM((Bt, S, E), jnp.bfloat16),                           # attn ctx
            ],
        ),
        compiler_params=pltpu.CompilerParams(
            dimension_semantics=("parallel",),
            vmem_limit_bytes=_vmem_limit_bytes(),
        ),
    )(x_p, pos_p, gamma_p, beta_p, w_qkv, b_qkv, w_out, b_out)

    return out_p[:, :, :E] if pad else out_p


def init_params(key, emb_dim, max_rel_pos):
    """Deterministic synthetic parameters matching nn.MultiheadAttention / nn.LayerNorm shapes."""
    k1, k2, k3 = jax.random.split(key, 3)
    return {
        "ln_gamma": jnp.ones((emb_dim,), jnp.float32),
        "ln_beta": jnp.zeros((emb_dim,), jnp.float32),
        "in_proj_weight": 0.05 * jax.random.normal(k1, (3 * emb_dim, emb_dim), jnp.float32),
        "in_proj_bias": 0.01 * jax.random.normal(k2, (3 * emb_dim,), jnp.float32),
        "out_proj_weight": 0.05 * jax.random.normal(k3, (emb_dim, emb_dim), jnp.float32),
        "out_proj_bias": jnp.zeros((emb_dim,), jnp.float32),
        "pos_matrix": get_positional_matrix(max_rel_pos, emb_dim),
    }


def reference(x, params, num_heads):
    """Pure-JAX f32 reference matching the PyTorch module (eval mode)."""
    B, S, E = x.shape
    D = E // num_heads
    mu = x.mean(-1, keepdims=True)
    var = ((x - mu) ** 2).mean(-1, keepdims=True)
    xn = (x - mu) / jnp.sqrt(var + 1e-5) * params["ln_gamma"] + params["ln_beta"]
    xp = xn + params["pos_matrix"][:S][None]
    w, b = params["in_proj_weight"], params["in_proj_bias"]
    q = (xp @ w[0:E].T + b[0:E]) / math.sqrt(D)
    k = xp @ w[E:2 * E].T + b[E:2 * E]
    v = xp @ w[2 * E:].T + b[2 * E:]
    heads = lambda t: t.reshape(B, S, num_heads, D).transpose(0, 2, 1, 3)
    qh, kh, vh = heads(q), heads(k), heads(v)
    p = jax.nn.softmax(jnp.einsum("bhqd,bhkd->bhqk", qh, kh), axis=-1)
    ctx = jnp.einsum("bhqk,bhkd->bhqd", p, vh).transpose(0, 2, 1, 3).reshape(B, S, E)
    out = ctx @ params["out_proj_weight"].T + params["out_proj_bias"]
    return out + x


if __name__ == "__main__":
    B, S, E, H = 2, 8, 32, 4
    MAX_REL_POS = 16

    key = jax.random.PRNGKey(0)
    kx, kp = jax.random.split(key)
    x = jax.random.normal(kx, (B, S, E), jnp.float32)
    params = init_params(kp, E, MAX_REL_POS)

    out = conformer_mhsa(x, params, num_heads=H)
    jax.block_until_ready(out)
    assert out.shape == (B, S, E) and out.dtype == x.dtype
    assert bool(jnp.all(jnp.isfinite(out)))

    ref = reference(x, params, H)
    max_diff = float(jnp.max(jnp.abs(out - ref)))
    # bf16 MXU operands + approx reciprocal -> loose tolerance vs the f32 reference.
    assert max_diff < 1e-1, f"max |kernel - ref| = {max_diff}"
    print("KERNEL_OK")
</pallas_src>

<mosaic_0001>
module attributes {stable_mosaic.version = 11 : i64} {
  func.func @mhsa_kernel(%arg0: i32, %arg1: memref<2x8x128xf32, #tpu.memory_space<vmem>>, %arg2: memref<8x128xf32, #tpu.memory_space<vmem>>, %arg3: memref<1x128xf32, #tpu.memory_space<vmem>>, %arg4: memref<1x128xf32, #tpu.memory_space<vmem>>, %arg5: memref<128x96xbf16, #tpu.memory_space<vmem>>, %arg6: memref<1x96xf32, #tpu.memory_space<vmem>>, %arg7: memref<32x128xbf16, #tpu.memory_space<vmem>>, %arg8: memref<1x128xf32, #tpu.memory_space<vmem>>, %arg9: memref<2x8x128xf32, #tpu.memory_space<vmem>>, %arg10: memref<8x8x8xbf16, #tpu.memory_space<vmem>>, %arg11: memref<2x8x32xbf16, #tpu.memory_space<vmem>>) attributes {dimension_semantics = [#tpu.dimension_semantics<parallel>], iteration_bounds = array<i64: 1>, scalar_prefetch = 0 : i64, scratch_operands = 2 : i64, tpu.core_type = #tpu.core_type<tc>, window_params = [{transform_indices = @transform_0, window_bounds = array<i64: 2, 8, 128>}, {pipeline_mode = #tpu.pipeline_mode<synchronous>, transform_indices = @transform_1, window_bounds = array<i64: 8, 128>}, {pipeline_mode = #tpu.pipeline_mode<synchronous>, transform_indices = @transform_2, window_bounds = array<i64: 1, 128>}, {pipeline_mode = #tpu.pipeline_mode<synchronous>, transform_indices = @transform_3, window_bounds = array<i64: 1, 128>}, {pipeline_mode = #tpu.pipeline_mode<synchronous>, transform_indices = @transform_4, window_bounds = array<i64: 128, 96>}, {pipeline_mode = #tpu.pipeline_mode<synchronous>, transform_indices = @transform_5, window_bounds = array<i64: 1, 96>}, {pipeline_mode = #tpu.pipeline_mode<synchronous>, transform_indices = @transform_6, window_bounds = array<i64: 32, 128>}, {pipeline_mode = #tpu.pipeline_mode<synchronous>, transform_indices = @transform_7, window_bounds = array<i64: 1, 128>}, {transform_indices = @transform_8, window_bounds = array<i64: 2, 8, 128>}]} {
    %c0 = arith.constant 0 : index
    %c0_0 = arith.constant 0 : index
    %c0_1 = arith.constant 0 : index
    %0 = vector.load %arg1[%c0, %c0_0, %c0_1] : memref<2x8x128xf32, #tpu.memory_space<vmem>>, vector<2x8x128xf32>
    %cst = arith.constant dense<0.000000e+00> : vector<2x8xf32>
    %1 = vector.multi_reduction <add>, %0, %cst [2] : vector<2x8x128xf32> to vector<2x8xf32>
    %2 = vector.shape_cast %1 : vector<2x8xf32> to vector<2x8x1xf32>
    %cst_2 = arith.constant 3.125000e-02 : f32
    %3 = vector.broadcast %cst_2 : f32 to vector<2x8x1xf32>
    %4 = arith.mulf %2, %3 : vector<2x8x1xf32>
    %5 = arith.mulf %0, %0 : vector<2x8x128xf32>
    %cst_3 = arith.constant dense<0.000000e+00> : vector<2x8xf32>
    %6 = vector.multi_reduction <add>, %5, %cst_3 [2] : vector<2x8x128xf32> to vector<2x8xf32>
    %7 = vector.shape_cast %6 : vector<2x8xf32> to vector<2x8x1xf32>
    %cst_4 = arith.constant 3.125000e-02 : f32
    %8 = vector.broadcast %cst_4 : f32 to vector<2x8x1xf32>
    %9 = arith.mulf %7, %8 : vector<2x8x1xf32>
    %10 = arith.mulf %4, %4 : vector<2x8x1xf32>
    %11 = arith.subf %9, %10 : vector<2x8x1xf32>
    %12 = vector.broadcast %4 : vector<2x8x1xf32> to vector<2x8x128xf32>
    %13 = arith.subf %0, %12 : vector<2x8x128xf32>
    %cst_5 = arith.constant 9.99999974E-6 : f32
    %14 = vector.broadcast %cst_5 : f32 to vector<2x8x1xf32>
    %15 = arith.addf %11, %14 : vector<2x8x1xf32>
    %16 = math.rsqrt %15 : vector<2x8x1xf32>
    %17 = vector.broadcast %16 : vector<2x8x1xf32> to vector<2x8x128xf32>
    %18 = arith.mulf %13, %17 : vector<2x8x128xf32>
    %c0_6 = arith.constant 0 : index
    %c0_7 = arith.constant 0 : index
    %19 = vector.load %arg3[%c0_6, %c0_7] : memref<1x128xf32, #tpu.memory_space<vmem>>, vector<1x128xf32>
    %20 = vector.shape_cast %19 : vector<1x128xf32> to vector<128xf32>
    %21 = vector.shape_cast %20 : vector<128xf32> to vector<1x1x128xf32>
    %22 = vector.broadcast %21 : vector<1x1x128xf32> to vector<2x8x128xf32>
    %23 = arith.mulf %18, %22 : vector<2x8x128xf32>
    %c0_8 = arith.constant 0 : index
    %c0_9 = arith.constant 0 : index
    %24 = vector.load %arg4[%c0_8, %c0_9] : memref<1x128xf32, #tpu.memory_space<vmem>>, vector<1x128xf32>
    %25 = vector.shape_cast %24 : vector<1x128xf32> to vector<128xf32>
    %26 = vector.shape_cast %25 : vector<128xf32> to vector<1x1x128xf32>
    %27 = vector.broadcast %26 : vector<1x1x128xf32> to vector<2x8x128xf32>
    %28 = arith.addf %23, %27 : vector<2x8x128xf32>
    %c0_10 = arith.constant 0 : index
    %c0_11 = arith.constant 0 : index
    %29 = vector.load %arg2[%c0_10, %c0_11] : memref<8x128xf32, #tpu.memory_space<vmem>>, vector<8x128xf32>
    %30 = vector.shape_cast %29 : vector<8x128xf32> to vector<1x8x128xf32>
    %31 = vector.broadcast %30 : vector<1x8x128xf32> to vector<2x8x128xf32>
    %32 = arith.addf %28, %31 : vector<2x8x128xf32>
    %33 = arith.truncf %32 : vector<2x8x128xf32> to vector<2x8x128xbf16>
    %34 = vector.shape_cast %33 : vector<2x8x128xbf16> to vector<16x128xbf16>
    %c0_12 = arith.constant 0 : index
    %c0_13 = arith.constant 0 : index
    %35 = vector.load %arg5[%c0_12, %c0_13] : memref<128x96xbf16, #tpu.memory_space<vmem>>, vector<128x96xbf16>
    %cst_14 = arith.constant dense<0.000000e+00> : vector<16x96xf32>
    %36 = tpu.matmul %34, %35, %cst_14 {dimension_numbers = #tpu.dot_dimension_numbers<[1], [0], [0], [1], [0, 0, 1, 1], [], []>} : vector<16x128xbf16>, vector<128x96xbf16>, vector<16x96xf32> -> vector<16x96xf32>
    %c0_15 = arith.constant 0 : index
    %c0_16 = arith.constant 0 : index
    %37 = vector.load %arg6[%c0_15, %c0_16] : memref<1x96xf32, #tpu.memory_space<vmem>>, vector<1x96xf32>
    %38 = vector.broadcast %37 : vector<1x96xf32> to vector<16x96xf32>
    %39 = arith.addf %36, %38 : vector<16x96xf32>
    %40 = vector.extract_strided_slice %39 {offsets = [0, 0], sizes = [16, 32], strides = [1, 1]} : vector<16x96xf32> to vector<16x32xf32>
    %41 = arith.truncf %40 : vector<16x32xf32> to vector<16x32xbf16>
    %42 = vector.shape_cast %41 : vector<16x32xbf16> to vector<2x8x4x8xbf16>
    %43 = tpu.transpose %42, [0, 2, 1, 3] : vector<2x8x4x8xbf16> -> vector<2x4x8x8xbf16>
    %44 = vector.shape_cast %43 : vector<2x4x8x8xbf16> to vector<8x8x8xbf16>
    %c0_17 = arith.constant 0 : index
    %c0_18 = arith.constant 0 : index
    %c0_19 = arith.constant 0 : index
    %45 = vector.load %arg10[%c0_17, %c0_18, %c0_19] : memref<8x8x8xbf16, #tpu.memory_space<vmem>>, vector<8x8x8xbf16>
    tpu.vector_store %arg10[%c0_17, %c0_18, %c0_19], %44 {strides = array<i32>} : memref<8x8x8xbf16, #tpu.memory_space<vmem>>, vector<8x8x8xbf16>,
    %46 = vector.extract_strided_slice %39 {offsets = [0, 32], sizes = [16, 32], strides = [1, 1]} : vector<16x96xf32> to vector<16x32xf32>
    %47 = arith.truncf %46 : vector<16x32xf32> to vector<16x32xbf16>
    %48 = vector.shape_cast %47 : vector<16x32xbf16> to vector<2x8x4x8xbf16>
    %49 = tpu.transpose %48, [0, 2, 1, 3] : vector<2x8x4x8xbf16> -> vector<2x4x8x8xbf16>
    %50 = vector.shape_cast %49 : vector<2x4x8x8xbf16> to vector<8x8x8xbf16>
    %51 = vector.extract_strided_slice %39 {offsets = [0, 64], sizes = [16, 32], strides = [1, 1]} : vector<16x96xf32> to vector<16x32xf32>
    %52 = arith.truncf %51 : vector<16x32xf32> to vector<16x32xbf16>
    %53 = vector.shape_cast %52 : vector<16x32xbf16> to vector<2x8x4x8xbf16>
    %54 = tpu.transpose %53, [0, 2, 1, 3] : vector<2x8x4x8xbf16> -> vector<2x4x8x8xbf16>
    %55 = vector.shape_cast %54 : vector<2x4x8x8xbf16> to vector<8x8x8xbf16>
    %c0_i32 = arith.constant 0 : i32
    %c8_i32 = arith.constant 8 : i32
    %56 = arith.muli %c0_i32, %c8_i32 : i32
    %57 = tpu.assume_multiple %56, 8 : i32
    %c0_20 = arith.constant 0 : index
    %58 = arith.index_cast %57 : i32 to index
    %c0_21 = arith.constant 0 : index
    %59 = vector.load %arg10[%c0_20, %58, %c0_21] : memref<8x8x8xbf16, #tpu.memory_space<vmem>>, vector<8x8x8xbf16>
    "tpu.trace_start"() <{level = 10 : i32, message = "bqd,bkd->bqk"}> : () -> ()
    %cst_22 = arith.constant dense<0.000000e+00> : vector<8x8x8xf32>
    %60 = tpu.matmul %59, %50, %cst_22 {dimension_numbers = #tpu.dot_dimension_numbers<[2], [2], [1], [1], [0, 0, 0, 1, 1, 1], [0], [0]>} : vector<8x8x8xbf16>, vector<8x8x8xbf16>, vector<8x8x8xf32> -> vector<8x8x8xf32>
    "tpu.trace_stop"() : () -> ()
    %cst_23 = arith.constant dense<0xFF800000> : vector<8x8xf32>
    %61 = vector.multi_reduction <maximumf>, %60, %cst_23 [2] : vector<8x8x8xf32> to vector<8x8xf32>
    %62 = vector.shape_cast %61 : vector<8x8xf32> to vector<8x8x1xf32>
    %63 = vector.broadcast %62 : vector<8x8x1xf32> to vector<8x8x8xf32>
    %64 = arith.subf %60, %63 : vector<8x8x8xf32>
    %65 = math.exp %64 : vector<8x8x8xf32>
    %cst_24 = arith.constant dense<0.000000e+00> : vector<8x8xf32>
    %66 = vector.multi_reduction <add>, %65, %cst_24 [2] : vector<8x8x8xf32> to vector<8x8xf32>
    %67 = vector.shape_cast %66 : vector<8x8xf32> to vector<8x8x1xf32>
    %68 = arith.truncf %65 : vector<8x8x8xf32> to vector<8x8x8xbf16>
    "tpu.trace_start"() <{level = 10 : i32, message = "bqk,bkd->bqd"}> : () -> ()
    %cst_25 = arith.constant dense<0.000000e+00> : vector<8x8x8xf32>
    %69 = tpu.matmul %68, %55, %cst_25 {dimension_numbers = #tpu.dot_dimension_numbers<[2], [1], [1], [2], [0, 0, 0, 1, 1, 2], [0], [0]>} : vector<8x8x8xbf16>, vector<8x8x8xbf16>, vector<8x8x8xf32> -> vector<8x8x8xf32>
    "tpu.trace_stop"() : () -> ()
    %70 = tpu.reciprocal %67 {approx = true} : vector<8x8x1xf32> -> vector<8x8x1xf32>
    %71 = vector.broadcast %70 : vector<8x8x1xf32> to vector<8x8x8xf32>
    %72 = arith.mulf %69, %71 : vector<8x8x8xf32>
    %73 = arith.truncf %72 : vector<8x8x8xf32> to vector<8x8x8xbf16>
    %74 = vector.shape_cast %73 : vector<8x8x8xbf16> to vector<2x4x8x8xbf16>
    %75 = tpu.transpose %74, [0, 2, 1, 3] : vector<2x4x8x8xbf16> -> vector<2x8x4x8xbf16>
    %76 = vector.shape_cast %75 : vector<2x8x4x8xbf16> to vector<2x8x32xbf16>
    %c0_26 = arith.constant 0 : index
    %77 = arith.index_cast %57 : i32 to index
    %c0_27 = arith.constant 0 : index
    %78 = vector.load %arg11[%c0_26, %77, %c0_27] : memref<2x8x32xbf16, #tpu.memory_space<vmem>>, vector<2x8x32xbf16>
    tpu.vector_store %arg11[%c0_26, %77, %c0_27], %76 {strides = array<i32>} : memref<2x8x32xbf16, #tpu.memory_space<vmem>>, vector<2x8x32xbf16>,
    %c1_i32 = arith.constant 1 : i32
    %c0_28 = arith.constant 0 : index
    %c0_29 = arith.constant 0 : index
    %c0_30 = arith.constant 0 : index
    %79 = vector.load %arg11[%c0_28, %c0_29, %c0_30] : memref<2x8x32xbf16, #tpu.memory_space<vmem>>, vector<2x8x32xbf16>
    %80 = vector.shape_cast %79 : vector<2x8x32xbf16> to vector<16x32xbf16>
    %c0_31 = arith.constant 0 : index
    %c0_32 = arith.constant 0 : index
    %81 = vector.load %arg7[%c0_31, %c0_32] : memref<32x128xbf16, #tpu.memory_space<vmem>>, vector<32x128xbf16>
    %cst_33 = arith.constant dense<0.000000e+00> : vector<16x128xf32>
    %82 = tpu.matmul %80, %81, %cst_33 {dimension_numbers = #tpu.dot_dimension_numbers<[1], [0], [0], [1], [0, 0, 1, 1], [], []>} : vector<16x32xbf16>, vector<32x128xbf16>, vector<16x128xf32> -> vector<16x128xf32>
    %c0_34 = arith.constant 0 : index
    %c0_35 = arith.constant 0 : index
    %83 = vector.load %arg8[%c0_34, %c0_35] : memref<1x128xf32, #tpu.memory_space<vmem>>, vector<1x128xf32>
    %84 = vector.broadcast %83 : vector<1x128xf32> to vector<16x128xf32>
    %85 = arith.addf %82, %84 : vector<16x128xf32>
    %86 = vector.shape_cast %85 : vector<16x128xf32> to vector<2x8x128xf32>
    %c0_36 = arith.constant 0 : index
    %c0_37 = arith.constant 0 : index
    %c0_38 = arith.constant 0 : index
    %87 = vector.load %arg1[%c0_36, %c0_37, %c0_38] : memref<2x8x128xf32, #tpu.memory_space<vmem>>, vector<2x8x128xf32>
    %88 = arith.addf %86, %87 : vector<2x8x128xf32>
    %c0_39 = arith.constant 0 : index
    %c0_40 = arith.constant 0 : index
    %c0_41 = arith.constant 0 : index
    %89 = vector.load %arg9[%c0_39, %c0_40, %c0_41] : memref<2x8x128xf32, #tpu.memory_space<vmem>>, vector<2x8x128xf32>
    tpu.vector_store %arg9[%c0_39, %c0_40, %c0_41], %88 {strides = array<i32>} : memref<2x8x128xf32, #tpu.memory_space<vmem>>, vector<2x8x128xf32>,
    return
  }
  func.func @transform_0(%arg0: i32) -> (i32, i32, i32) {
    %c0_i32 = arith.constant 0 : i32
    %c0_i32_0 = arith.constant 0 : i32
    %c0_i32_1 = arith.constant 0 : i32
    return %arg0, %c0_i32, %c0_i32_0 : i32, i32, i32
  }
  func.func @transform_1(%arg0: i32) -> (i32, i32) {
    %c0_i32 = arith.constant 0 : i32
    %c0_i32_0 = arith.constant 0 : i32
    %c0_i32_1 = arith.constant 0 : i32
    return %c0_i32, %c0_i32_0 : i32, i32
  }
  func.func @transform_2(%arg0: i32) -> (i32, i32) {
    %c0_i32 = arith.constant 0 : i32
    %c0_i32_0 = arith.constant 0 : i32
    %c0_i32_1 = arith.constant 0 : i32
    return %c0_i32, %c0_i32_0 : i32, i32
  }
  func.func @transform_3(%arg0: i32) -> (i32, i32) {
    %c0_i32 = arith.constant 0 : i32
    %c0_i32_0 = arith.constant 0 : i32
    %c0_i32_1 = arith.constant 0 : i32
    return %c0_i32, %c0_i32_0 : i32, i32
  }
  func.func @transform_4(%arg0: i32) -> (i32, i32) {
    %c0_i32 = arith.constant 0 : i32
    %c0_i32_0 = arith.constant 0 : i32
    %c0_i32_1 = arith.constant 0 : i32
    return %c0_i32, %c0_i32_0 : i32, i32
  }
  func.func @transform_5(%arg0: i32) -> (i32, i32) {
    %c0_i32 = arith.constant 0 : i32
    %c0_i32_0 = arith.constant 0 : i32
    %c0_i32_1 = arith.constant 0 : i32
    return %c0_i32, %c0_i32_0 : i32, i32
  }
  func.func @transform_6(%arg0: i32) -> (i32, i32) {
    %c0_i32 = arith.constant 0 : i32
    %c0_i32_0 = arith.constant 0 : i32
    %c0_i32_1 = arith.constant 0 : i32
    return %c0_i32, %c0_i32_0 : i32, i32
  }
  func.func @transform_7(%arg0: i32) -> (i32, i32) {
    %c0_i32 = arith.constant 0 : i32
    %c0_i32_0 = arith.constant 0 : i32
    %c0_i32_1 = arith.constant 0 : i32
    return %c0_i32, %c0_i32_0 : i32, i32
  }
  func.func @transform_8(%arg0: i32) -> (i32, i32, i32) {
    %c0_i32 = arith.constant 0 : i32
    %c0_i32_0 = arith.constant 0 : i32
    %c0_i32_1 = arith.constant 0 : i32
    return %arg0, %c0_i32, %c0_i32_0 : i32, i32, i32
  }
}

</mosaic_0001>

<llo_original>
// kernel: tpu_custom_call.1
$region0: #{tpu_custom_call.1}
  #allocation0 [shape = 'u32[]', space=smem, size = 0x4, offset = 0x4, fixed_abs, tag = 'smem constant byte address 0x4 - core index']
  #allocation1 [shape = 'u32[144,128]{1,0:T(1,128)}', space=vmem, size = 0x12000, scoped, tag = 'internal scratch']
  #allocation2 [shape = 'bf16[8,8,8]{2,1,0:T(8,128)(2,1)}', space=vmem, size = 0x4000, scoped, tag = 'scratch operand']
  #allocation3 [shape = 'bf16[2,8,32]{2,1,0:T(8,128)(2,1)}', space=vmem, size = 0x1000, scoped, tag = 'scratch operand']
  %s0 = inlined_call_operand.vmem [shape: f32[2,8,128], index: 0, kind: input, shape index: {}]
  %s1 = inlined_call_operand.vmem [shape: f32[8,128], index: 1, kind: input, shape index: {}]
  %s2 = inlined_call_operand.vmem [shape: f32[1,128], index: 2, kind: input, shape index: {}]
  %s3 = inlined_call_operand.vmem [shape: f32[1,128], index: 3, kind: input, shape index: {}]
  %s4 = inlined_call_operand.vmem [shape: bf16[128,96], index: 4, kind: input, shape index: {}]
  %s5 = inlined_call_operand.vmem [shape: f32[1,96], index: 5, kind: input, shape index: {}]
  %s6 = inlined_call_operand.vmem [shape: bf16[32,128], index: 6, kind: input, shape index: {}]
  %s7 = inlined_call_operand.vmem [shape: f32[1,128], index: 7, kind: input, shape index: {}]
  %s8 = inlined_call_operand.hbm [shape: f32[2,8,128], index: 8, kind: output, shape index: {}]
  %s9 = sld [smem:[#allocation0]]
  $region42: #{tpu_custom_call.1} parent=0
    _
  %s11 = ssub.s32 1, %s9
  %s12 = scalar_select 0, %s11, %s9
  $region1: #{tpu_custom_call.1} parent=0
    #allocation4 [shape = 'u8[8192]{0}', space=vmem, size = 0x2000, scoped, tag = 'output window, operand 0, single buffered']
    #allocation5 [shape = 's32[1]{0}', space=sflag, size = 0x4, scoped, tag = 'scoped memory for tpu_custom_call.1']
    %13 = vsyncpa [#allocation5], 0
    // Predicated region
    $region2: #{tpu_custom_call.1} parent=1 // pred_check
      _
    $region3: #{tpu_custom_call.1} parent=1 // pred_check_branch
      %15 = sbr.rel (0) target = $region5
    $region4: #{tpu_custom_call.1} parent=1 // pred_region
      _
    $region5: #{tpu_custom_call.1} parent=1 // pred_fallthru
      _
    // Predicated region
    $region6: #{tpu_custom_call.1} parent=1 // pred_check
      _
    $region7: #{tpu_custom_call.1} parent=1 // pred_check_branch
      %17 = sbr.rel (0) target = $region9
    $region8: #{tpu_custom_call.1} parent=1 // pred_region
      _
    $region9: #{tpu_custom_call.1} parent=1 // pred_fallthru
      _
    // Predicated region
    $region10: #{tpu_custom_call.1} parent=1 // pred_check
      _
    $region11: #{tpu_custom_call.1} parent=1 // pred_check_branch
      %19 = sbr.rel (0) target = $region13
    $region12: #{tpu_custom_call.1} parent=1 // pred_region
      _
    $region13: #{tpu_custom_call.1} parent=1 // pred_fallthru
      _
    // Predicated region
    $region14: #{tpu_custom_call.1} parent=1 // pred_check
      _
    $region15: #{tpu_custom_call.1} parent=1 // pred_check_branch
      %21 = sbr.rel (0) target = $region17
    $region16: #{tpu_custom_call.1} parent=1 // pred_region
      _
    $region17: #{tpu_custom_call.1} parent=1 // pred_fallthru
      _
    // Predicated region
    $region18: #{tpu_custom_call.1} parent=1 // pred_check
      _
    $region19: #{tpu_custom_call.1} parent=1 // pred_check_branch
      %23 = sbr.rel (0) target = $region21
    $region20: #{tpu_custom_call.1} parent=1 // pred_region
      _
    $region21: #{tpu_custom_call.1} parent=1 // pred_fallthru
      _
    // Predicated region
    $region22: #{tpu_custom_call.1} parent=1 // pred_check
      _
    $region23: #{tpu_custom_call.1} parent=1 // pred_check_branch
      %25 = sbr.rel (0) target = $region25
    $region24: #{tpu_custom_call.1} parent=1 // pred_region
      _
    $region25: #{tpu_custom_call.1} parent=1 // pred_fallthru
      _
    // Predicated region
    $region26: #{tpu_custom_call.1} parent=1 // pred_check
      _
    $region27: #{tpu_custom_call.1} parent=1 // pred_check_branch
      %27 = sbr.rel (0) target = $region29
    $region28: #{tpu_custom_call.1} parent=1 // pred_region
      _
    $region29: #{tpu_custom_call.1} parent=1 // pred_fallthru
      _
    // Predicated region
    $region30: #{tpu_custom_call.1} parent=1 // pred_check
      _
    $region31: #{tpu_custom_call.1} parent=1 // pred_check_branch
      %29 = sbr.rel (0) target = $region33
    $region32: #{tpu_custom_call.1} parent=1 // pred_region
      _
    $region33: #{tpu_custom_call.1} parent=1 // pred_fallthru
      _
    %v31 = vld [vmem:[%s0] sm:$0xff]
    %v32 = vld [vmem:[%s0 + $0x8] sm:$0xff]
    %33 = vadd.xlane.f32.xlu0 %v31
    %v34 = vpop.xlane.xlu0 %33
    %35 = vadd.xlane.f32.xlu0 %v32
    %v36 = vpop.xlane.xlu0 %35
    %v37 = vmul.f32 %v34, 0.03125
    %v38 = vmul.f32 %v36, 0.03125
    %v39 = vmul.f32 %v31, %v31
    %v40 = vmul.f32 %v32, %v32
    %41 = vadd.xlane.f32.xlu0 %v39
    %v42 = vpop.xlane.xlu0 %41
    %43 = vadd.xlane.f32.xlu0 %v40
    %v44 = vpop.xlane.xlu0 %43
    %v45 = vmul.f32 %v42, 0.03125
    %v46 = vmul.f32 %v44, 0.03125
    %v47 = vmul.f32 %v37, %v37
    %v48 = vmul.f32 %v38, %v38
    %v49 = vsub.f32 %v45, %v47
    %v50 = vsub.f32 %v46, %v48
    %v51 = vsub.f32 %v31, %v37
    %v52 = vsub.f32 %v32, %v38
    %v53 = vadd.f32 %v49, 1e-05
    %v54 = vadd.f32 %v50, 1e-05
    %v55 = vrsqrt.pop %v53
    %v56 = vrsqrt.pop %v54
    %v57 = vmul.f32 %v51, %v55
    %v58 = vmul.f32 %v52, %v56
    %v59 = vld [vmem:[%s2] sm:$0x1]
    %v61 = vlaneseq
    %v62 = vshrl.u32 %v61, 7
    %v63 = vsub.s32 0, %v62
    %v64 = vrot.slane %v59, %v63
    %v66 = vmul.f32 %v57, %v64
    %v67 = vmul.f32 %v58, %v64
    %v68 = vld [vmem:[%s3] sm:$0x1]
    %v70 = vlaneseq
    %v71 = vshrl.u32 %v70, 7
    %v72 = vsub.s32 0, %v71
    %v73 = vrot.slane %v68, %v72
    %v75 = vadd.f32 %v66, %v73
    %v76 = vadd.f32 %v67, %v73
    %v77 = vld [vmem:[%s1] sm:$0xff]
    %v78 = vadd.f32 %v75, %v77
    %v79 = vadd.f32 %v76, %v77
    %v80 = vpack.c.bf16 %v78, %v78
    %v81 = vpack.c.bf16 %v79, %v79
    %v82 = vld [vmem:[%s4] sm:$0xf]
    %v83 = vld [vmem:[%s4 + $0x4] sm:$0xf]
    %v84 = vld [vmem:[%s4 + $0x8] sm:$0xf]
    %v85 = vld [vmem:[%s4 + $0xc] sm:$0xf]
    %v86 = vld [vmem:[%s4 + $0x10] sm:$0xf]
    %v87 = vld [vmem:[%s4 + $0x14] sm:$0xf]
    %v88 = vld [vmem:[%s4 + $0x18] sm:$0xf]
    %v89 = vld [vmem:[%s4 + $0x1c] sm:$0xf]
    %v90 = vld [vmem:[%s4 + $0x20] sm:$0xf]
    %v91 = vld [vmem:[%s4 + $0x24] sm:$0xf]
    %v92 = vld [vmem:[%s4 + $0x28] sm:$0xf]
    %v93 = vld [vmem:[%s4 + $0x2c] sm:$0xf]
    %v94 = vld [vmem:[%s4 + $0x30] sm:$0xf]
    %v95 = vld [vmem:[%s4 + $0x34] sm:$0xf]
    %v96 = vld [vmem:[%s4 + $0x38] sm:$0xf]
    %v97 = vld [vmem:[%s4 + $0x3c] sm:$0xf]
    %v98 = vld [vmem:[%s5] sm:$0x1]
    %v100 = vlaneseq
    %v101 = vshrl.u32 %v100, 7
    %v102 = vsub.s32 0, %v101
    %v103 = vrot.slane %v98, %v102
    %v107 = vunpack.c.l.b16 %v80
    %v108 = vunpack.c.l.b16 %v81
    %v109 = vpack.c.b16 %v108, %v107
    %v127 = vunpack.c.l.b16 %v82
    %v128 = vunpack.c.l.b16 %v83
    %v129 = vunpack.c.l.b16 %v84
    %v130 = vunpack.c.l.b16 %v85
    %v131 = vunpack.c.l.b16 %v86
    %v132 = vunpack.c.l.b16 %v87
    %v133 = vunpack.c.l.b16 %v88
    %v134 = vunpack.c.l.b16 %v89
    %v135 = vunpack.c.l.b16 %v90
    %v136 = vunpack.c.l.b16 %v91
    %v137 = vunpack.c.l.b16 %v92
    %v138 = vunpack.c.l.b16 %v93
    %v139 = vunpack.c.l.b16 %v94
    %v140 = vunpack.c.l.b16 %v95
    %v141 = vunpack.c.l.b16 %v96
    %v142 = vunpack.c.l.b16 %v97
    %v143 = vpack.c.b16 %v128, %v127
    %v144 = vpack.c.b16 %v130, %v129
    %v145 = vpack.c.b16 %v132, %v131
    %v146 = vpack.c.b16 %v134, %v133
    %v147 = vpack.c.b16 %v136, %v135
    %v148 = vpack.c.b16 %v138, %v137
    %v149 = vpack.c.b16 %v140, %v139
    %v150 = vpack.c.b16 %v142, %v141
    %159 = vmatprep.subr.bf16.mxu0 0
    %160 = vmatpush1.bf16.msra.mxu0 %v143
    %161 = vmatprep.subr.bf16.mxu0 0
    %162 = vmatpush1.bf16.msra.mxu0 %v144
    %163 = vmatprep.subr.bf16.mxu0 0
    %164 = vmatpush1.bf16.msra.mxu0 %v145
    %165 = vmatprep.subr.bf16.mxu0 0
    %166 = vmatpush1.bf16.msra.mxu0 %v146
    %167 = vmatprep.subr.bf16.mxu0 0
    %168 = vmatpush1.bf16.msra.mxu0 %v147
    %169 = vmatprep.subr.bf16.mxu0 0
    %170 = vmatpush1.bf16.msra.mxu0 %v148
    %171 = vmatprep.subr.bf16.mxu0 0
    %172 = vmatpush1.bf16.msra.mxu0 %v149
    %173 = vmatprep.subr.bf16.mxu0 0
    %174 = vmatpush1.bf16.msra.mxu0 %v150
    %175 = vmatprep.subr.bf16.mxu0 0
    %176 = vmatpush1.bf16.msra.mxu0 0
    %177 = vmatprep.subr.bf16.mxu0 0
    %178 = vmatpush1.bf16.msra.mxu0 0
    %179 = vmatprep.subr.bf16.mxu0 0
    %180 = vmatpush1.bf16.msra.mxu0 0
    %181 = vmatprep.subr.bf16.mxu0 0
    %182 = vmatpush1.bf16.msra.mxu0 0
    %183 = vmatprep.subr.bf16.mxu0 0
    %184 = vmatpush1.bf16.msra.mxu0 0
    %185 = vmatprep.subr.bf16.mxu0 0
    %186 = vmatpush1.bf16.msra.mxu0 0
    %187 = vmatprep.subr.bf16.mxu0 0
    %188 = vmatpush1.bf16.msra.mxu0 0
    %189 = vmatprep.subr.bf16.mxu0 0
    %190 = vmatpush1.bf16.msra.mxu0 0
    %191 = vmatprep.mubr.bf16.mxu0 0
    %192 = vmatmul.mubr.bf16.gmra.mrb[0].mxu0 %v109
    %v193 = vpop.f32.mrb[0].mxu0
    %v194 = vadd.f32 %v103, %v193
    %v195 = vpop.f32.mrb[0].mxu0
    %v196 = vpop.f32.mrb[0].mxu0
    %v197 = vadd.f32 %v103, %v196
    %v198 = vpop.f32.mrb[0].mxu0
    %199 = vdwg.mxu0
    %v200 = vpack.c.bf16 %v197, %v194
    %202 = vrot.lane.b32.xlu0 %v200, 120
    %v203 = vpop.permute.xlu0 %202
    %204 = vrot.lane.b32.xlu0 %v200, 112
    %v205 = vpop.permute.xlu0 %204
    %206 = vrot.lane.b32.xlu0 %v200, 104
    %v207 = vpop.permute.xlu0 %206
    %v210 = vpack.i.b16 %v203, %v200
    %v212 = vshrl.u32 %v200, 16
    %v213 = vshrl.u32 %v203, 16
    %v214 = vpack.i.b16 %v213, %v212
    %v218 = vpack.i.b16 %v207, %v205
    %v220 = vshrl.u32 %v205, 16
    %v221 = vshrl.u32 %v207, 16
    %v222 = vpack.i.b16 %v221, %v220
    %v225 = vpack.i.b16 0, 0
    %v227 = vshrl.u32 0, 16
    %v228 = vpack.i.b16 %v227, %v227
    %v230 = vcombine.high %v210, %v225
    %v232 = vunpack.c.l.s4 1983009808
    %v233 = vunpack.c.0.s8 %v232
    %v234 = vlaneseq
    %v235 = vshrl.u32 %v234, 7
    %v236 = vsub.s32 %v233, %v235
    %v237 = vrot.slane %v210, %v236
    %v239 = vunpack.c.l.s4 1983009808
    %v240 = vunpack.c.0.s8 %v239
    %v241 = vlaneseq
    %v242 = vshrl.u32 %v241, 7
    %v243 = vsub.s32 %v240, %v242
    %v244 = vrot.slane %v230, %v243
    %v245 = vcombine.high %v218, %v225
    %v247 = vunpack.c.l.s4 1983009808
    %v248 = vunpack.c.0.s8 %v247
    %v249 = vlaneseq
    %v250 = vshrl.u32 %v249, 7
    %v251 = vsub.s32 %v248, %v250
    %v252 = vrot.slane %v218, %v251
    %v254 = vunpack.c.l.s4 1983009808
    %v255 = vunpack.c.0.s8 %v254
    %v256 = vlaneseq
    %v257 = vshrl.u32 %v256, 7
    %v258 = vsub.s32 %v255, %v257
    %v259 = vrot.slane %v245, %v258
    %v260 = vcombine.low %v237, %v252
    %v261 = vcombine.high %v237, %v252
    %v263 = vunpack.c.l.s4 1934713408
    %v264 = vunpack.c.0.s8 %v263
    %v265 = vlaneseq
    %v266 = vshrl.u32 %v265, 7
    %v267 = vsub.s32 %v264, %v266
    %v268 = vrot.slane %v260, %v267
    %v270 = vunpack.c.l.s4 1934713408
    %v271 = vunpack.c.0.s8 %v270
    %v272 = vlaneseq
    %v273 = vshrl.u32 %v272, 7
    %v274 = vsub.s32 %v271, %v273
    %v275 = vrot.slane %v261, %v274
    %v276 = vcombine.low %v244, %v259
    %v277 = vcombine.high %v244, %v259
    %v279 = vunpack.c.l.s4 1934713408
    %v280 = vunpack.c.0.s8 %v279
    %v281 = vlaneseq
    %v282 = vshrl.u32 %v281, 7
    %v283 = vsub.s32 %v280, %v282
    %v284 = vrot.slane %v276, %v283
    %v286 = vunpack.c.l.s4 1934713408
    %v287 = vunpack.c.0.s8 %v286
    %v288 = vlaneseq
    %v289 = vshrl.u32 %v288, 7
    %v290 = vsub.s32 %v287, %v289
    %v291 = vrot.slane %v277, %v290
    %v292 = vcombine.high %v268, 0
    %v293 = vcombine.high %v275, 0
    %v294 = vcombine.high %v284, 0
    %v295 = vcombine.high %v291, 0
    %v296 = vcombine.high %v214, %v228
    %v298 = vunpack.c.l.s4 1983009808
    %v299 = vunpack.c.0.s8 %v298
    %v300 = vlaneseq
    %v301 = vshrl.u32 %v300, 7
    %v302 = vsub.s32 %v299, %v301
    %v303 = vrot.slane %v214, %v302
    %v305 = vunpack.c.l.s4 1983009808
    %v306 = vunpack.c.0.s8 %v305
    %v307 = vlaneseq
    %v308 = vshrl.u32 %v307, 7
    %v309 = vsub.s32 %v306, %v308
    %v310 = vrot.slane %v296, %v309
    %v311 = vcombine.high %v222, %v228
    %v313 = vunpack.c.l.s4 1983009808
    %v314 = vunpack.c.0.s8 %v313
    %v315 = vlaneseq
    %v316 = vshrl.u32 %v315, 7
    %v317 = vsub.s32 %v314, %v316
    %v318 = vrot.slane %v222, %v317
    %v320 = vunpack.c.l.s4 1983009808
    %v321 = vunpack.c.0.s8 %v320
    %v322 = vlaneseq
    %v323 = vshrl.u32 %v322, 7
    %v324 = vsub.s32 %v321, %v323
    %v325 = vrot.slane %v311, %v324
    %v326 = vcombine.low %v303, %v318
    %v327 = vcombine.high %v303, %v318
    %v329 = vunpack.c.l.s4 1934713408
    %v330 = vunpack.c.0.s8 %v329
    %v331 = vlaneseq
    %v332 = vshrl.u32 %v331, 7
    %v333 = vsub.s32 %v330, %v332
    %v334 = vrot.slane %v326, %v333
    %v336 = vunpack.c.l.s4 1934713408
    %v337 = vunpack.c.0.s8 %v336
    %v338 = vlaneseq
    %v339 = vshrl.u32 %v338, 7
    %v340 = vsub.s32 %v337, %v339
    %v341 = vrot.slane %v327, %v340
    %v342 = vcombine.low %v310, %v325
    %v343 = vcombine.high %v310, %v325
    %v345 = vunpack.c.l.s4 1934713408
    %v346 = vunpack.c.0.s8 %v345
    %v347 = vlaneseq
    %v348 = vshrl.u32 %v347, 7
    %v349 = vsub.s32 %v346, %v348
    %v350 = vrot.slane %v342, %v349
    %v352 = vunpack.c.l.s4 1934713408
    %v353 = vunpack.c.0.s8 %v352
    %v354 = vlaneseq
    %v355 = vshrl.u32 %v354, 7
    %v356 = vsub.s32 %v353, %v355
    %v357 = vrot.slane %v343, %v356
    %v358 = vcombine.high %v334, 0
    %v359 = vcombine.high %v341, 0
    %v360 = vcombine.high %v350, 0
    %v361 = vcombine.high %v357, 0
    %v362 = vcombine.low %v268, %v275
    %v364 = vunpack.c.l.s4 1983009808
    %v365 = vunpack.c.0.s8 %v364
    %v366 = vlaneseq
    %v367 = vshrl.u32 %v366, 7
    %v368 = vsub.s32 %v365, %v367
    %v369 = vrot.slane %v362, %v368
    %v370 = vcombine.low %v292, %v293
    %v372 = vunpack.c.l.s4 1983009808
    %v373 = vunpack.c.0.s8 %v372
    %v374 = vlaneseq
    %v375 = vshrl.u32 %v374, 7
    %v376 = vsub.s32 %v373, %v375
    %v377 = vrot.slane %v370, %v376
    %v378 = vcombine.low %v369, %v377
    %v380 = vunpack.c.l.s4 1934713408
    %v381 = vunpack.c.0.s8 %v380
    %v382 = vlaneseq
    %v383 = vshrl.u32 %v382, 7
    %v384 = vsub.s32 %v381, %v383
    %v385 = vrot.slane %v378, %v384
    %v386 = vcombine.high %v385, 0
    %v387 = vcombine.low %v334, %v341
    %v389 = vunpack.c.l.s4 1983009808
    %v390 = vunpack.c.0.s8 %v389
    %v391 = vlaneseq
    %v392 = vshrl.u32 %v391, 7
    %v393 = vsub.s32 %v390, %v392
    %v394 = vrot.slane %v387, %v393
    %v395 = vcombine.low %v358, %v359
    %v397 = vunpack.c.l.s4 1983009808
    %v398 = vunpack.c.0.s8 %v397
    %v399 = vlaneseq
    %v400 = vshrl.u32 %v399, 7
    %v401 = vsub.s32 %v398, %v400
    %v402 = vrot.slane %v395, %v401
    %v403 = vcombine.low %v394, %v402
    %v405 = vunpack.c.l.s4 1934713408
    %v406 = vunpack.c.0.s8 %v405
    %v407 = vlaneseq
    %v408 = vshrl.u32 %v407, 7
    %v409 = vsub.s32 %v406, %v408
    %v410 = vrot.slane %v403, %v409
    %v411 = vcombine.high %v410, 0
    %v412 = vcombine.low %v284, %v291
    %v414 = vunpack.c.l.s4 1983009808
    %v415 = vunpack.c.0.s8 %v414
    %v416 = vlaneseq
    %v417 = vshrl.u32 %v416, 7
    %v418 = vsub.s32 %v415, %v417
    %v419 = vrot.slane %v412, %v418
    %v420 = vcombine.low %v294, %v295
    %v422 = vunpack.c.l.s4 1983009808
    %v423 = vunpack.c.0.s8 %v422
    %v424 = vlaneseq
    %v425 = vshrl.u32 %v424, 7
    %v426 = vsub.s32 %v423, %v425
    %v427 = vrot.slane %v420, %v426
    %v428 = vcombine.low %v419, %v427
    %v430 = vunpack.c.l.s4 1934713408
    %v431 = vunpack.c.0.s8 %v430
    %v432 = vlaneseq
    %v433 = vshrl.u32 %v432, 7
    %v434 = vsub.s32 %v431, %v433
    %v435 = vrot.slane %v428, %v434
    %v436 = vcombine.high %v435, 0
    %v437 = vcombine.low %v350, %v357
    %v439 = vunpack.c.l.s4 1983009808
    %v440 = vunpack.c.0.s8 %v439
    %v441 = vlaneseq
    %v442 = vshrl.u32 %v441, 7
    %v443 = vsub.s32 %v440, %v442
    %v444 = vrot.slane %v437, %v443
    %v445 = vcombine.low %v360, %v361
    %v447 = vunpack.c.l.s4 1983009808
    %v448 = vunpack.c.0.s8 %v447
    %v449 = vlaneseq
    %v450 = vshrl.u32 %v449, 7
    %v451 = vsub.s32 %v448, %v450
    %v452 = vrot.slane %v445, %v451
    %v453 = vcombine.low %v444, %v452
    %v455 = vunpack.c.l.s4 1934713408
    %v456 = vunpack.c.0.s8 %v455
    %v457 = vlaneseq
    %v458 = vshrl.u32 %v457, 7
    %v459 = vsub.s32 %v456, %v458
    %v460 = vrot.slane %v453, %v459
    %v461 = vcombine.high %v460, 0
    %v464 = vpack.i.b16 %v410, %v385
    %v466 = vshrl.u32 %v385, 16
    %v467 = vshrl.u32 %v410, 16
    %v468 = vpack.i.b16 %v467, %v466
    %v472 = vpack.i.b16 %v411, %v386
    %v474 = vshrl.u32 %v386, 16
    %v475 = vshrl.u32 %v411, 16
    %v476 = vpack.i.b16 %v475, %v474
    %v480 = vpack.i.b16 %v460, %v435
    %v482 = vshrl.u32 %v435, 16
    %v483 = vshrl.u32 %v460, 16
    %v484 = vpack.i.b16 %v483, %v482
    %v488 = vpack.i.b16 %v461, %v436
    %v490 = vshrl.u32 %v436, 16
    %v491 = vshrl.u32 %v461, 16
    %v492 = vpack.i.b16 %v491, %v490
    %vm494 = vcmask 60416
    %495 = vst.msk [vmem:[#allocation2] sm:$0xf] %vm494, %v464
    %496 = vst.msk [vmem:[#allocation2 + $0x4] sm:$0xf] %vm494, %v468
    %497 = vst.msk [vmem:[#allocation2 + $0x8] sm:$0xf] %vm494, %v472
    %498 = vst.msk [vmem:[#allocation2 + $0xc] sm:$0xf] %vm494, %v476
    %499 = vst.msk [vmem:[#allocation2 + $0x10] sm:$0xf] %vm494, %v480
    %500 = vst.msk [vmem:[#allocation2 + $0x14] sm:$0xf] %vm494, %v484
    %501 = vst.msk [vmem:[#allocation2 + $0x18] sm:$0xf] %vm494, %v488
    %502 = vst.msk [vmem:[#allocation2 + $0x1c] sm:$0xf] %vm494, %v492
    %503 = vrot.lane.b32.xlu0 %v200, 96
    %v504 = vpop.permute.xlu0 %503
    %505 = vrot.lane.b32.xlu0 %v203, 96
    %v506 = vpop.permute.xlu0 %505
    %507 = vrot.lane.b32.xlu0 %v205, 96
    %v508 = vpop.permute.xlu0 %507
    %509 = vrot.lane.b32.xlu0 %v207, 96
    %v510 = vpop.permute.xlu0 %509
    %v513 = vpack.i.b16 %v506, %v504
    %v515 = vshrl.u32 %v504, 16
    %v516 = vshrl.u32 %v506, 16
    %v517 = vpack.i.b16 %v516, %v515
    %v521 = vpack.i.b16 %v510, %v508
    %v523 = vshrl.u32 %v508, 16
    %v524 = vshrl.u32 %v510, 16
    %v525 = vpack.i.b16 %v524, %v523
    %v527 = vcombine.high %v513, %v225
    %v529 = vunpack.c.l.s4 1983009808
    %v530 = vunpack.c.0.s8 %v529
    %v531 = vlaneseq
    %v532 = vshrl.u32 %v531, 7
    %v533 = vsub.s32 %v530, %v532
    %v534 = vrot.slane %v513, %v533
    %v536 = vunpack.c.l.s4 1983009808
    %v537 = vunpack.c.0.s8 %v536
    %v538 = vlaneseq
    %v539 = vshrl.u32 %v538, 7
    %v540 = vsub.s32 %v537, %v539
    %v541 = vrot.slane %v527, %v540
    %v542 = vcombine.high %v521, %v225
    %v544 = vunpack.c.l.s4 1983009808
    %v545 = vunpack.c.0.s8 %v544
    %v546 = vlaneseq
    %v547 = vshrl.u32 %v546, 7
    %v548 = vsub.s32 %v545, %v547
    %v549 = vrot.slane %v521, %v548
    %v551 = vunpack.c.l.s4 1983009808
    %v552 = vunpack.c.0.s8 %v551
    %v553 = vlaneseq
    %v554 = vshrl.u32 %v553, 7
    %v555 = vsub.s32 %v552, %v554
    %v556 = vrot.slane %v542, %v555
    %v557 = vcombine.low %v534, %v549
    %v558 = vcombine.high %v534, %v549
    %v560 = vunpack.c.l.s4 1934713408
    %v561 = vunpack.c.0.s8 %v560
    %v562 = vlaneseq
    %v563 = vshrl.u32 %v562, 7
    %v564 = vsub.s32 %v561, %v563
    %v565 = vrot.slane %v557, %v564
    %v567 = vunpack.c.l.s4 1934713408
    %v568 = vunpack.c.0.s8 %v567
    %v569 = vlaneseq
    %v570 = vshrl.u32 %v569, 7
    %v571 = vsub.s32 %v568, %v570
    %v572 = vrot.slane %v558, %v571
    %v573 = vcombine.low %v541, %v556
    %v574 = vcombine.high %v541, %v556
    %v576 = vunpack.c.l.s4 1934713408
    %v577 = vunpack.c.0.s8 %v576
    %v578 = vlaneseq
    %v579 = vshrl.u32 %v578, 7
    %v580 = vsub.s32 %v577, %v579
    %v581 = vrot.slane %v573, %v580
    %v583 = vunpack.c.l.s4 1934713408
    %v584 = vunpack.c.0.s8 %v583
    %v585 = vlaneseq
    %v586 = vshrl.u32 %v585, 7
    %v587 = vsub.s32 %v584, %v586
    %v588 = vrot.slane %v574, %v587
    %v589 = vcombine.high %v565, 0
    %v590 = vcombine.high %v572, 0
    %v591 = vcombine.high %v581, 0
    %v592 = vcombine.high %v588, 0
    %v593 = vcombine.high %v517, %v228
    %v595 = vunpack.c.l.s4 1983009808
    %v596 = vunpack.c.0.s8 %v595
    %v597 = vlaneseq
    %v598 = vshrl.u32 %v597, 7
    %v599 = vsub.s32 %v596, %v598
    %v600 = vrot.slane %v517, %v599
    %v602 = vunpack.c.l.s4 1983009808
    %v603 = vunpack.c.0.s8 %v602
    %v604 = vlaneseq
    %v605 = vshrl.u32 %v604, 7
    %v606 = vsub.s32 %v603, %v605
    %v607 = vrot.slane %v593, %v606
    %v608 = vcombine.high %v525, %v228
    %v610 = vunpack.c.l.s4 1983009808
    %v611 = vunpack.c.0.s8 %v610
    %v612 = vlaneseq
    %v613 = vshrl.u32 %v612, 7
    %v614 = vsub.s32 %v611, %v613
    %v615 = vrot.slane %v525, %v614
    %v617 = vunpack.c.l.s4 1983009808
    %v618 = vunpack.c.0.s8 %v617
    %v619 = vlaneseq
    %v620 = vshrl.u32 %v619, 7
    %v621 = vsub.s32 %v618, %v620
    %v622 = vrot.slane %v608, %v621
    %v623 = vcombine.low %v600, %v615
    %v624 = vcombine.high %v600, %v615
    %v626 = vunpack.c.l.s4 1934713408
    %v627 = vunpack.c.0.s8 %v626
    %v628 = vlaneseq
    %v629 = vshrl.u32 %v628, 7
    %v630 = vsub.s32 %v627, %v629
    %v631 = vrot.slane %v623, %v630
    %v633 = vunpack.c.l.s4 1934713408
    %v634 = vunpack.c.0.s8 %v633
    %v635 = vlaneseq
    %v636 = vshrl.u32 %v635, 7
    %v637 = vsub.s32 %v634, %v636
    %v638 = vrot.slane %v624, %v637
    %v639 = vcombine.low %v607, %v622
    %v640 = vcombine.high %v607, %v622
    %v642 = vunpack.c.l.s4 1934713408
    %v643 = vunpack.c.0.s8 %v642
    %v644 = vlaneseq
    %v645 = vshrl.u32 %v644, 7
    %v646 = vsub.s32 %v643, %v645
    %v647 = vrot.slane %v639, %v646
    %v649 = vunpack.c.l.s4 1934713408
    %v650 = vunpack.c.0.s8 %v649
    %v651 = vlaneseq
    %v652 = vshrl.u32 %v651, 7
    %v653 = vsub.s32 %v650, %v652
    %v654 = vrot.slane %v640, %v653
    %v655 = vcombine.high %v631, 0
    %v656 = vcombine.high %v638, 0
    %v657 = vcombine.high %v647, 0
    %v658 = vcombine.high %v654, 0
    %v659 = vcombine.low %v565, %v572
    %v661 = vunpack.c.l.s4 1983009808
    %v662 = vunpack.c.0.s8 %v661
    %v663 = vlaneseq
    %v664 = vshrl.u32 %v663, 7
    %v665 = vsub.s32 %v662, %v664
    %v666 = vrot.slane %v659, %v665
    %v667 = vcombine.low %v589, %v590
    %v669 = vunpack.c.l.s4 1983009808
    %v670 = vunpack.c.0.s8 %v669
    %v671 = vlaneseq
    %v672 = vshrl.u32 %v671, 7
    %v673 = vsub.s32 %v670, %v672
    %v674 = vrot.slane %v667, %v673
    %v675 = vcombine.low %v666, %v674
    %v677 = vunpack.c.l.s4 1934713408
    %v678 = vunpack.c.0.s8 %v677
    %v679 = vlaneseq
    %v680 = vshrl.u32 %v679, 7
    %v681 = vsub.s32 %v678, %v680
    %v682 = vrot.slane %v675, %v681
    %v683 = vcombine.high %v682, 0
    %v684 = vcombine.low %v631, %v638
    %v686 = vunpack.c.l.s4 1983009808
    %v687 = vunpack.c.0.s8 %v686
    %v688 = vlaneseq
    %v689 = vshrl.u32 %v688, 7
    %v690 = vsub.s32 %v687, %v689
    %v691 = vrot.slane %v684, %v690
    %v692 = vcombine.low %v655, %v656
    %v694 = vunpack.c.l.s4 1983009808
    %v695 = vunpack.c.0.s8 %v694
    %v696 = vlaneseq
    %v697 = vshrl.u32 %v696, 7
    %v698 = vsub.s32 %v695, %v697
    %v699 = vrot.slane %v692, %v698
    %v700 = vcombine.low %v691, %v699
    %v702 = vunpack.c.l.s4 1934713408
    %v703 = vunpack.c.0.s8 %v702
    %v704 = vlaneseq
    %v705 = vshrl.u32 %v704, 7
    %v706 = vsub.s32 %v703, %v705
    %v707 = vrot.slane %v700, %v706
    %v708 = vcombine.high %v707, 0
    %v709 = vcombine.low %v581, %v588
    %v711 = vunpack.c.l.s4 1983009808
    %v712 = vunpack.c.0.s8 %v711
    %v713 = vlaneseq
    %v714 = vshrl.u32 %v713, 7
    %v715 = vsub.s32 %v712, %v714
    %v716 = vrot.slane %v709, %v715
    %v717 = vcombine.low %v591, %v592
    %v719 = vunpack.c.l.s4 1983009808
    %v720 = vunpack.c.0.s8 %v719
    %v721 = vlaneseq
    %v722 = vshrl.u32 %v721, 7
    %v723 = vsub.s32 %v720, %v722
    %v724 = vrot.slane %v717, %v723
    %v725 = vcombine.low %v716, %v724
    %v727 = vunpack.c.l.s4 1934713408
    %v728 = vunpack.c.0.s8 %v727
    %v729 = vlaneseq
    %v730 = vshrl.u32 %v729, 7
    %v731 = vsub.s32 %v728, %v730
    %v732 = vrot.slane %v725, %v731
    %v733 = vcombine.high %v732, 0
    %v734 = vcombine.low %v647, %v654
    %v736 = vunpack.c.l.s4 1983009808
    %v737 = vunpack.c.0.s8 %v736
    %v738 = vlaneseq
    %v739 = vshrl.u32 %v738, 7
    %v740 = vsub.s32 %v737, %v739
    %v741 = vrot.slane %v734, %v740
    %v742 = vcombine.low %v657, %v658
    %v744 = vunpack.c.l.s4 1983009808
    %v745 = vunpack.c.0.s8 %v744
    %v746 = vlaneseq
    %v747 = vshrl.u32 %v746, 7
    %v748 = vsub.s32 %v745, %v747
    %v749 = vrot.slane %v742, %v748
    %v750 = vcombine.low %v741, %v749
    %v752 = vunpack.c.l.s4 1934713408
    %v753 = vunpack.c.0.s8 %v752
    %v754 = vlaneseq
    %v755 = vshrl.u32 %v754, 7
    %v756 = vsub.s32 %v753, %v755
    %v757 = vrot.slane %v750, %v756
    %v758 = vcombine.high %v757, 0
    %v761 = vpack.i.b16 %v707, %v682
    %v762 = vshrl.u32 %v682, 16
    %v763 = vshrl.u32 %v707, 16
    %v764 = vpack.i.b16 %v763, %v762
    %v767 = vpack.i.b16 %v708, %v683
    %v768 = vshrl.u32 %v683, 16
    %v769 = vshrl.u32 %v708, 16
    %v770 = vpack.i.b16 %v769, %v768
    %v773 = vpack.i.b16 %v757, %v732
    %v774 = vshrl.u32 %v732, 16
    %v775 = vshrl.u32 %v757, 16
    %v776 = vpack.i.b16 %v775, %v774
    %v779 = vpack.i.b16 %v758, %v733
    %v780 = vshrl.u32 %v733, 16
    %v781 = vshrl.u32 %v758, 16
    %v782 = vpack.i.b16 %v781, %v780
    %783 = vrot.lane.b32.xlu0 %v200, 64
    %v784 = vpop.permute.xlu0 %783
    %785 = vrot.lane.b32.xlu0 %v203, 64
    %v786 = vpop.permute.xlu0 %785
    %787 = vrot.lane.b32.xlu0 %v205, 64
    %v788 = vpop.permute.xlu0 %787
    %789 = vrot.lane.b32.xlu0 %v207, 64
    %v790 = vpop.permute.xlu0 %789
    %v793 = vpack.i.b16 %v786, %v784
    %v795 = vshrl.u32 %v784, 16
    %v796 = vshrl.u32 %v786, 16
    %v797 = vpack.i.b16 %v796, %v795
    %v801 = vpack.i.b16 %v790, %v788
    %v803 = vshrl.u32 %v788, 16
    %v804 = vshrl.u32 %v790, 16
    %v805 = vpack.i.b16 %v804, %v803
    %v807 = vcombine.high %v793, %v225
    %v809 = vunpack.c.l.s4 1983009808
    %v810 = vunpack.c.0.s8 %v809
    %v811 = vlaneseq
    %v812 = vshrl.u32 %v811, 7
    %v813 = vsub.s32 %v810, %v812
    %v814 = vrot.slane %v793, %v813
    %v816 = vunpack.c.l.s4 1983009808
    %v817 = vunpack.c.0.s8 %v816
    %v818 = vlaneseq
    %v819 = vshrl.u32 %v818, 7
    %v820 = vsub.s32 %v817, %v819
    %v821 = vrot.slane %v807, %v820
    %v822 = vcombine.high %v801, %v225
    %v824 = vunpack.c.l.s4 1983009808
    %v825 = vunpack.c.0.s8 %v824
    %v826 = vlaneseq
    %v827 = vshrl.u32 %v826, 7
    %v828 = vsub.s32 %v825, %v827
    %v829 = vrot.slane %v801, %v828
    %v831 = vunpack.c.l.s4 1983009808
    %v832 = vunpack.c.0.s8 %v831
    %v833 = vlaneseq
    %v834 = vshrl.u32 %v833, 7
    %v835 = vsub.s32 %v832, %v834
    %v836 = vrot.slane %v822, %v835
    %v837 = vcombine.low %v814, %v829
    %v838 = vcombine.high %v814, %v829
    %v840 = vunpack.c.l.s4 1934713408
    %v841 = vunpack.c.0.s8 %v840
    %v842 = vlaneseq
    %v843 = vshrl.u32 %v842, 7
    %v844 = vsub.s32 %v841, %v843
    %v845 = vrot.slane %v837, %v844
    %v847 = vunpack.c.l.s4 1934713408
    %v848 = vunpack.c.0.s8 %v847
    %v849 = vlaneseq
    %v850 = vshrl.u32 %v849, 7
    %v851 = vsub.s32 %v848, %v850
    %v852 = vrot.slane %v838, %v851
    %v853 = vcombine.low %v821, %v836
    %v854 = vcombine.high %v821, %v836
    %v856 = vunpack.c.l.s4 1934713408
    %v857 = vunpack.c.0.s8 %v856
    %v858 = vlaneseq
    %v859 = vshrl.u32 %v858, 7
    %v860 = vsub.s32 %v857, %v859
    %v861 = vrot.slane %v853, %v860
    %v863 = vunpack.c.l.s4 1934713408
    %v864 = vunpack.c.0.s8 %v863
    %v865 = vlaneseq
    %v866 = vshrl.u32 %v865, 7
    %v867 = vsub.s32 %v864, %v866
    %v868 = vrot.slane %v854, %v867
    %v869 = vcombine.high %v845, 0
    %v870 = vcombine.high %v852, 0
    %v871 = vcombine.high %v861, 0
    %v872 = vcombine.high %v868, 0
    %v873 = vcombine.high %v797, %v228
    %v875 = vunpack.c.l.s4 1983009808
    %v876 = vunpack.c.0.s8 %v875
    %v877 = vlaneseq
    %v878 = vshrl.u32 %v877, 7
    %v879 = vsub.s32 %v876, %v878
    %v880 = vrot.slane %v797, %v879
    %v882 = vunpack.c.l.s4 1983009808
    %v883 = vunpack.c.0.s8 %v882
    %v884 = vlaneseq
    %v885 = vshrl.u32 %v884, 7
    %v886 = vsub.s32 %v883, %v885
    %v887 = vrot.slane %v873, %v886
    %v888 = vcombine.high %v805, %v228
    %v890 = vunpack.c.l.s4 1983009808
    %v891 = vunpack.c.0.s8 %v890
    %v892 = vlaneseq
    %v893 = vshrl.u32 %v892, 7
    %v894 = vsub.s32 %v891, %v893
    %v895 = vrot.slane %v805, %v894
    %v897 = vunpack.c.l.s4 1983009808
    %v898 = vunpack.c.0.s8 %v897
    %v899 = vlaneseq
    %v900 = vshrl.u32 %v899, 7
    %v901 = vsub.s32 %v898, %v900
    %v902 = vrot.slane %v888, %v901
    %v903 = vcombine.low %v880, %v895
    %v904 = vcombine.high %v880, %v895
    %v906 = vunpack.c.l.s4 1934713408
    %v907 = vunpack.c.0.s8 %v906
    %v908 = vlaneseq
    %v909 = vshrl.u32 %v908, 7
    %v910 = vsub.s32 %v907, %v909
    %v911 = vrot.slane %v903, %v910
    %v913 = vunpack.c.l.s4 1934713408
    %v914 = vunpack.c.0.s8 %v913
    %v915 = vlaneseq
    %v916 = vshrl.u32 %v915, 7
    %v917 = vsub.s32 %v914, %v916
    %v918 = vrot.slane %v904, %v917
    %v919 = vcombine.low %v887, %v902
    %v920 = vcombine.high %v887, %v902
    %v922 = vunpack.c.l.s4 1934713408
    %v923 = vunpack.c.0.s8 %v922
    %v924 = vlaneseq
    %v925 = vshrl.u32 %v924, 7
    %v926 = vsub.s32 %v923, %v925
    %v927 = vrot.slane %v919, %v926
    %v929 = vunpack.c.l.s4 1934713408
    %v930 = vunpack.c.0.s8 %v929
    %v931 = vlaneseq
    %v932 = vshrl.u32 %v931, 7
    %v933 = vsub.s32 %v930, %v932
    %v934 = vrot.slane %v920, %v933
    %v935 = vcombine.high %v911, 0
    %v936 = vcombine.high %v918, 0
    %v937 = vcombine.high %v927, 0
    %v938 = vcombine.high %v934, 0
    %v939 = vcombine.low %v845, %v852
    %v941 = vunpack.c.l.s4 1983009808
    %v942 = vunpack.c.0.s8 %v941
    %v943 = vlaneseq
    %v944 = vshrl.u32 %v943, 7
    %v945 = vsub.s32 %v942, %v944
    %v946 = vrot.slane %v939, %v945
    %v947 = vcombine.low %v869, %v870
    %v949 = vunpack.c.l.s4 1983009808
    %v950 = vunpack.c.0.s8 %v949
    %v951 = vlaneseq
    %v952 = vshrl.u32 %v951, 7
    %v953 = vsub.s32 %v950, %v952
    %v954 = vrot.slane %v947, %v953
    %v955 = vcombine.low %v946, %v954
    %v957 = vunpack.c.l.s4 1934713408
    %v958 = vunpack.c.0.s8 %v957
    %v959 = vlaneseq
    %v960 = vshrl.u32 %v959, 7
    %v961 = vsub.s32 %v958, %v960
    %v962 = vrot.slane %v955, %v961
    %v963 = vcombine.high %v962, 0
    %v964 = vcombine.low %v911, %v918
    %v966 = vunpack.c.l.s4 1983009808
    %v967 = vunpack.c.0.s8 %v966
    %v968 = vlaneseq
    %v969 = vshrl.u32 %v968, 7
    %v970 = vsub.s32 %v967, %v969
    %v971 = vrot.slane %v964, %v970
    %v972 = vcombine.low %v935, %v936
    %v974 = vunpack.c.l.s4 1983009808
    %v975 = vunpack.c.0.s8 %v974
    %v976 = vlaneseq
    %v977 = vshrl.u32 %v976, 7
    %v978 = vsub.s32 %v975, %v977
    %v979 = vrot.slane %v972, %v978
    %v980 = vcombine.low %v971, %v979
    %v982 = vunpack.c.l.s4 1934713408
    %v983 = vunpack.c.0.s8 %v982
    %v984 = vlaneseq
    %v985 = vshrl.u32 %v984, 7
    %v986 = vsub.s32 %v983, %v985
    %v987 = vrot.slane %v980, %v986
    %v988 = vcombine.high %v987, 0
    %v989 = vcombine.low %v861, %v868
    %v991 = vunpack.c.l.s4 1983009808
    %v992 = vunpack.c.0.s8 %v991
    %v993 = vlaneseq
    %v994 = vshrl.u32 %v993, 7
    %v995 = vsub.s32 %v992, %v994
    %v996 = vrot.slane %v989, %v995
    %v997 = vcombine.low %v871, %v872
    %v999 = vunpack.c.l.s4 1983009808
    %v1000 = vunpack.c.0.s8 %v999
    %v1001 = vlaneseq
    %v1002 = vshrl.u32 %v1001, 7
    %v1003 = vsub.s32 %v1000, %v1002
    %v1004 = vrot.slane %v997, %v1003
    %v1005 = vcombine.low %v996, %v1004
    %v1007 = vunpack.c.l.s4 1934713408
    %v1008 = vunpack.c.0.s8 %v1007
    %v1009 = vlaneseq
    %v1010 = vshrl.u32 %v1009, 7
    %v1011 = vsub.s32 %v1008, %v1010
    %v1012 = vrot.slane %v1005, %v1011
    %v1013 = vcombine.high %v1012, 0
    %v1014 = vcombine.low %v927, %v934
    %v1016 = vunpack.c.l.s4 1983009808
    %v1017 = vunpack.c.0.s8 %v1016
    %v1018 = vlaneseq
    %v1019 = vshrl.u32 %v1018, 7
    %v1020 = vsub.s32 %v1017, %v1019
    %v1021 = vrot.slane %v1014, %v1020
    %v1022 = vcombine.low %v937, %v938
    %v1024 = vunpack.c.l.s4 1983009808
    %v1025 = vunpack.c.0.s8 %v1024
    %v1026 = vlaneseq
    %v1027 = vshrl.u32 %v1026, 7
    %v1028 = vsub.s32 %v1025, %v1027
    %v1029 = vrot.slane %v1022, %v1028
    %v1030 = vcombine.low %v1021, %v1029
    %v1032 = vunpack.c.l.s4 1934713408
    %v1033 = vunpack.c.0.s8 %v1032
    %v1034 = vlaneseq
    %v1035 = vshrl.u32 %v1034, 7
    %v1036 = vsub.s32 %v1033, %v1035
    %v1037 = vrot.slane %v1030, %v1036
    %v1038 = vcombine.high %v1037, 0
    %v1041 = vpack.i.b16 %v987, %v962
    %v1042 = vshrl.u32 %v962, 16
    %v1043 = vshrl.u32 %v987, 16
    %v1044 = vpack.i.b16 %v1043, %v1042
    %v1047 = vpack.i.b16 %v988, %v963
    %v1048 = vshrl.u32 %v963, 16
    %v1049 = vshrl.u32 %v988, 16
    %v1050 = vpack.i.b16 %v1049, %v1048
    %v1053 = vpack.i.b16 %v1037, %v1012
    %v1054 = vshrl.u32 %v1012, 16
    %v1055 = vshrl.u32 %v1037, 16
    %v1056 = vpack.i.b16 %v1055, %v1054
    %v1059 = vpack.i.b16 %v1038, %v1013
    %v1060 = vshrl.u32 %v1013, 16
    %v1061 = vshrl.u32 %v1038, 16
    %v1062 = vpack.i.b16 %v1061, %v1060
    %v1063 = vld [vmem:[#allocation2] sm:$0xf]
    %v1064 = vld [vmem:[#allocation2 + $0x4] sm:$0xf]
    %v1065 = vld [vmem:[#allocation2 + $0x8] sm:$0xf]
    %v1066 = vld [vmem:[#allocation2 + $0xc] sm:$0xf]
    %v1067 = vld [vmem:[#allocation2 + $0x10] sm:$0xf]
    %v1068 = vld [vmem:[#allocation2 + $0x14] sm:$0xf]
    %v1069 = vld [vmem:[#allocation2 + $0x18] sm:$0xf]
    %v1070 = vld [vmem:[#allocation2 + $0x1c] sm:$0xf]
    %vm1071 = vcmask 64512
    %v1073 = vsel %vm1071, %v1063, 0
    %v1076 = vsel %vm1071, %v761, 0
    %1078 = vmatprep.subr.bf16.mxu0 0
    %1079 = vmatpush1.bf16.xpose.msra.mxu0 %v1076
    %1080 = vmatprep.subr.bf16.mxu0 0
    %1081 = vmatpush1.bf16.xpose.msra.mxu0 0
    %1082 = vmatprep.subr.bf16.mxu0 0
    %1083 = vmatpush1.bf16.xpose.msra.mxu0 0
    %1084 = vmatprep.subr.bf16.mxu0 0
    %1085 = vmatpush1.bf16.xpose.msra.mxu0 0
    %1086 = vmatprep.subr.bf16.mxu0 0
    %1087 = vmatpush1.bf16.xpose.msra.mxu0 0
    %1088 = vmatprep.subr.bf16.mxu0 0
    %1089 = vmatpush1.bf16.xpose.msra.mxu0 0
    %1090 = vmatprep.subr.bf16.mxu0 0
    %1091 = vmatpush1.bf16.xpose.msra.mxu0 0
    %1092 = vmatprep.subr.bf16.mxu0 0
    %1093 = vmatpush1.bf16.xpose.msra.mxu0 0
    %1094 = vmatprep.subr.bf16.mxu0 0
    %1095 = vmatpush1.bf16.xpose.msra.mxu0 0
    %1096 = vmatprep.subr.bf16.mxu0 0
    %1097 = vmatpush1.bf16.xpose.msra.mxu0 0
    %1098 = vmatprep.subr.bf16.mxu0 0
    %1099 = vmatpush1.bf16.xpose.msra.mxu0 0
    %1100 = vmatprep.subr.bf16.mxu0 0
    %1101 = vmatpush1.bf16.xpose.msra.mxu0 0
    %1102 = vmatprep.subr.bf16.mxu0 0
    %1103 = vmatpush1.bf16.xpose.msra.mxu0 0
    %1104 = vmatprep.subr.bf16.mxu0 0
    %1105 = vmatpush1.bf16.xpose.msra.mxu0 0
    %1106 = vmatprep.subr.bf16.mxu0 0
    %1107 = vmatpush1.bf16.xpose.msra.mxu0 0
    %1108 = vmatprep.subr.bf16.mxu0 0
    %1109 = vmatpush1.bf16.xpose.msra.mxu0 0
    %1110 = vmatprep.mubr.bf16.mxu0 0
    %1111 = vmatmul.mubr.bf16.gmra.mrb[0].mxu0 %v1073
    %v1112 = vpop.f32.mrb[0].mxu0
    %v1113 = vadd.f32 0.0, %v1112
    %v1114 = vpop.f32.mrb[0].mxu0
    %v1115 = vpop.f32.mrb[0].mxu0
    %v1116 = vpop.f32.mrb[0].mxu0
    %1117 = vdwg.mxu0
    %v1119 = vsel %vm1071, %v1064, 0
    %v1122 = vsel %vm1071, %v764, 0
    %1124 = vmatprep.subr.bf16.mxu0 0
    %1125 = vmatpush1.bf16.xpose.msra.mxu0 %v1122
    %1126 = vmatprep.subr.bf16.mxu0 0
    %1127 = vmatpush1.bf16.xpose.msra.mxu0 0
    %1128 = vmatprep.subr.bf16.mxu0 0
    %1129 = vmatpush1.bf16.xpose.msra.mxu0 0
    %1130 = vmatprep.subr.bf16.mxu0 0
    %1131 = vmatpush1.bf16.xpose.msra.mxu0 0
    %1132 = vmatprep.subr.bf16.mxu0 0
    %1133 = vmatpush1.bf16.xpose.msra.mxu0 0
    %1134 = vmatprep.subr.bf16.mxu0 0
    %1135 = vmatpush1.bf16.xpose.msra.mxu0 0
    %1136 = vmatprep.subr.bf16.mxu0 0
    %1137 = vmatpush1.bf16.xpose.msra.mxu0 0
    %1138 = vmatprep.subr.bf16.mxu0 0
    %1139 = vmatpush1.bf16.xpose.msra.mxu0 0
    %1140 = vmatprep.subr.bf16.mxu0 0
    %1141 = vmatpush1.bf16.xpose.msra.mxu0 0
    %1142 = vmatprep.subr.bf16.mxu0 0
    %1143 = vmatpush1.bf16.xpose.msra.mxu0 0
    %1144 = vmatprep.subr.bf16.mxu0 0
    %1145 = vmatpush1.bf16.xpose.msra.mxu0 0
    %1146 = vmatprep.subr.bf16.mxu0 0
    %1147 = vmatpush1.bf16.xpose.msra.mxu0 0
    %1148 = vmatprep.subr.bf16.mxu0 0
    %1149 = vmatpush1.bf16.xpose.msra.mxu0 0
    %1150 = vmatprep.subr.bf16.mxu0 0
    %1151 = vmatpush1.bf16.xpose.msra.mxu0 0
    %1152 = vmatprep.subr.bf16.mxu0 0
    %1153 = vmatpush1.bf16.xpose.msra.mxu0 0
    %1154 = vmatprep.subr.bf16.mxu0 0
    %1155 = vmatpush1.bf16.xpose.msra.mxu0 0
    %1156 = vmatprep.mubr.bf16.mxu0 0
    %1157 = vmatmul.mubr.bf16.gmra.mrb[0].mxu0 %v1119
    %v1158 = vpop.f32.mrb[0].mxu0
    %v1159 = vadd.f32 0.0, %v1158
    %v1160 = vpop.f32.mrb[0].mxu0
    %v1161 = vpop.f32.mrb[0].mxu0
    %v1162 = vpop.f32.mrb[0].mxu0
    %1163 = vdwg.mxu0
    %v1165 = vsel %vm1071, %v1065, 0
    %v1168 = vsel %vm1071, %v767, 0
    %1170 = vmatprep.subr.bf16.mxu0 0
    %1171 = vmatpush1.bf16.xpose.msra.mxu0 %v1168
    %1172 = vmatprep.subr.bf16.mxu0 0
    %1173 = vmatpush1.bf16.xpose.msra.mxu0 0
    %1174 = vmatprep.subr.bf16.mxu0 0
    %1175 = vmatpush1.bf16.xpose.msra.mxu0 0
    %1176 = vmatprep.subr.bf16.mxu0 0
    %1177 = vmatpush1.bf16.xpose.msra.mxu0 0
    %1178 = vmatprep.subr.bf16.mxu0 0
    %1179 = vmatpush1.bf16.xpose.msra.mxu0 0
    %1180 = vmatprep.subr.bf16.mxu0 0
    %1181 = vmatpush1.bf16.xpose.msra.mxu0 0
    %1182 = vmatprep.subr.bf16.mxu0 0
    %1183 = vmatpush1.bf16.xpose.msra.mxu0 0
    %1184 = vmatprep.subr.bf16.mxu0 0
    %1185 = vmatpush1.bf16.xpose.msra.mxu0 0
    %1186 = vmatprep.subr.bf16.mxu0 0
    %1187 = vmatpush1.bf16.xpose.msra.mxu0 0
    %1188 = vmatprep.subr.bf16.mxu0 0
    %1189 = vmatpush1.bf16.xpose.msra.mxu0 0
    %1190 = vmatprep.subr.bf16.mxu0 0
    %1191 = vmatpush1.bf16.xpose.msra.mxu0 0
    %1192 = vmatprep.subr.bf16.mxu0 0
    %1193 = vmatpush1.bf16.xpose.msra.mxu0 0
    %1194 = vmatprep.subr.bf16.mxu0 0
    %1195 = vmatpush1.bf16.xpose.msra.mxu0 0
    %1196 = vmatprep.subr.bf16.mxu0 0
    %1197 = vmatpush1.bf16.xpose.msra.mxu0 0
    %1198 = vmatprep.subr.bf16.mxu0 0
    %1199 = vmatpush1.bf16.xpose.msra.mxu0 0
    %1200 = vmatprep.subr.bf16.mxu0 0
    %1201 = vmatpush1.bf16.xpose.msra.mxu0 0
    %1202 = vmatprep.mubr.bf16.mxu0 0
    %1203 = vmatmul.mubr.bf16.gmra.mrb[0].mxu0 %v1165
    %v1204 = vpop.f32.mrb[0].mxu0
    %v1205 = vadd.f32 0.0, %v1204
    %v1206 = vpop.f32.mrb[0].mxu0
    %v1207 = vpop.f32.mrb[0].mxu0
    %v1208 = vpop.f32.mrb[0].mxu0
    %1209 = vdwg.mxu0
    %v1211 = vsel %vm1071, %v1066, 0
    %v1214 = vsel %vm1071, %v770, 0
    %1216 = vmatprep.subr.bf16.mxu0 0
    %1217 = vmatpush1.bf16.xpose.msra.mxu0 %v1214
    %1218 = vmatprep.subr.bf16.mxu0 0
    %1219 = vmatpush1.bf16.xpose.msra.mxu0 0
    %1220 = vmatprep.subr.bf16.mxu0 0
    %1221 = vmatpush1.bf16.xpose.msra.mxu0 0
    %1222 = vmatprep.subr.bf16.mxu0 0
    %1223 = vmatpush1.bf16.xpose.msra.mxu0 0
    %1224 = vmatprep.subr.bf16.mxu0 0
    %1225 = vmatpush1.bf16.xpose.msra.mxu0 0
    %1226 = vmatprep.subr.bf16.mxu0 0
    %1227 = vmatpush1.bf16.xpose.msra.mxu0 0
    %1228 = vmatprep.subr.bf16.mxu0 0
    %1229 = vmatpush1.bf16.xpose.msra.mxu0 0
    %1230 = vmatprep.subr.bf16.mxu0 0
    %1231 = vmatpush1.bf16.xpose.msra.mxu0 0
    %1232 = vmatprep.subr.bf16.mxu0 0
    %1233 = vmatpush1.bf16.xpose.msra.mxu0 0
    %1234 = vmatprep.subr.bf16.mxu0 0
    %1235 = vmatpush1.bf16.xpose.msra.mxu0 0
    %1236 = vmatprep.subr.bf16.mxu0 0
    %1237 = vmatpush1.bf16.xpose.msra.mxu0 0
    %1238 = vmatprep.subr.bf16.mxu0 0
    %1239 = vmatpush1.bf16.xpose.msra.mxu0 0
    %1240 = vmatprep.subr.bf16.mxu0 0
    %1241 = vmatpush1.bf16.xpose.msra.mxu0 0
    %1242 = vmatprep.subr.bf16.mxu0 0
    %1243 = vmatpush1.bf16.xpose.msra.mxu0 0
    %1244 = vmatprep.subr.bf16.mxu0 0
    %1245 = vmatpush1.bf16.xpose.msra.mxu0 0
    %1246 = vmatprep.subr.bf16.mxu0 0
    %1247 = vmatpush1.bf16.xpose.msra.mxu0 0
    %1248 = vmatprep.mubr.bf16.mxu0 0
    %1249 = vmatmul.mubr.bf16.gmra.mrb[0].mxu0 %v1211
    %v1250 = vpop.f32.mrb[0].mxu0
    %v1251 = vadd.f32 0.0, %v1250
    %v1252 = vpop.f32.mrb[0].mxu0
    %v1253 = vpop.f32.mrb[0].mxu0
    %v1254 = vpop.f32.mrb[0].mxu0
    %1255 = vdwg.mxu0
    %v1257 = vsel %vm1071, %v1067, 0
    %v1260 = vsel %vm1071, %v773, 0
    %1262 = vmatprep.subr.bf16.mxu0 0
    %1263 = vmatpush1.bf16.xpose.msra.mxu0 %v1260
    %1264 = vmatprep.subr.bf16.mxu0 0
    %1265 = vmatpush1.bf16.xpose.msra.mxu0 0
    %1266 = vmatprep.subr.bf16.mxu0 0
    %1267 = vmatpush1.bf16.xpose.msra.mxu0 0
    %1268 = vmatprep.subr.bf16.mxu0 0
    %1269 = vmatpush1.bf16.xpose.msra.mxu0 0
    %1270 = vmatprep.subr.bf16.mxu0 0
    %1271 = vmatpush1.bf16.xpose.msra.mxu0 0
    %1272 = vmatprep.subr.bf16.mxu0 0
    %1273 = vmatpush1.bf16.xpose.msra.mxu0 0
    %1274 = vmatprep.subr.bf16.mxu0 0
    %1275 = vmatpush1.bf16.xpose.msra.mxu0 0
    %1276 = vmatprep.subr.bf16.mxu0 0
    %1277 = vmatpush1.bf16.xpose.msra.mxu0 0
    %1278 = vmatprep.subr.bf16.mxu0 0
    %1279 = vmatpush1.bf16.xpose.msra.mxu0 0
    %1280 = vmatprep.subr.bf16.mxu0 0
    %1281 = vmatpush1.bf16.xpose.msra.mxu0 0
    %1282 = vmatprep.subr.bf16.mxu0 0
    %1283 = vmatpush1.bf16.xpose.msra.mxu0 0
    %1284 = vmatprep.subr.bf16.mxu0 0
    %1285 = vmatpush1.bf16.xpose.msra.mxu0 0
    %1286 = vmatprep.subr.bf16.mxu0 0
    %1287 = vmatpush1.bf16.xpose.msra.mxu0 0
    %1288 = vmatprep.subr.bf16.mxu0 0
    %1289 = vmatpush1.bf16.xpose.msra.mxu0 0
    %1290 = vmatprep.subr.bf16.mxu0 0
    %1291 = vmatpush1.bf16.xpose.msra.mxu0 0
    %1292 = vmatprep.subr.bf16.mxu0 0
    %1293 = vmatpush1.bf16.xpose.msra.mxu0 0
    %1294 = vmatprep.mubr.bf16.mxu0 0
    %1295 = vmatmul.mubr.bf16.gmra.mrb[0].mxu0 %v1257
    %v1296 = vpop.f32.mrb[0].mxu0
    %v1297 = vadd.f32 0.0, %v1296
    %v1298 = vpop.f32.mrb[0].mxu0
    %v1299 = vpop.f32.mrb[0].mxu0
    %v1300 = vpop.f32.mrb[0].mxu0
    %1301 = vdwg.mxu0
    %v1303 = vsel %vm1071, %v1068, 0
    %v1306 = vsel %vm1071, %v776, 0
    %1308 = vmatprep.subr.bf16.mxu0 0
    %1309 = vmatpush1.bf16.xpose.msra.mxu0 %v1306
    %1310 = vmatprep.subr.bf16.mxu0 0
    %1311 = vmatpush1.bf16.xpose.msra.mxu0 0
    %1312 = vmatprep.subr.bf16.mxu0 0
    %1313 = vmatpush1.bf16.xpose.msra.mxu0 0
    %1314 = vmatprep.subr.bf16.mxu0 0
    %1315 = vmatpush1.bf16.xpose.msra.mxu0 0
    %1316 = vmatprep.subr.bf16.mxu0 0
    %1317 = vmatpush1.bf16.xpose.msra.mxu0 0
    %1318 = vmatprep.subr.bf16.mxu0 0
    %1319 = vmatpush1.bf16.xpose.msra.mxu0 0
    %1320 = vmatprep.subr.bf16.mxu0 0
    %1321 = vmatpush1.bf16.xpose.msra.mxu0 0
    %1322 = vmatprep.subr.bf16.mxu0 0
    %1323 = vmatpush1.bf16.xpose.msra.mxu0 0
    %1324 = vmatprep.subr.bf16.mxu0 0
    %1325 = vmatpush1.bf16.xpose.msra.mxu0 0
    %1326 = vmatprep.subr.bf16.mxu0 0
    %1327 = vmatpush1.bf16.xpose.msra.mxu0 0
    %1328 = vmatprep.subr.bf16.mxu0 0
    %1329 = vmatpush1.bf16.xpose.msra.mxu0 0
    %1330 = vmatprep.subr.bf16.mxu0 0
    %1331 = vmatpush1.bf16.xpose.msra.mxu0 0
    %1332 = vmatprep.subr.bf16.mxu0 0
    %1333 = vmatpush1.bf16.xpose.msra.mxu0 0
    %1334 = vmatprep.subr.bf16.mxu0 0
    %1335 = vmatpush1.bf16.xpose.msra.mxu0 0
    %1336 = vmatprep.subr.bf16.mxu0 0
    %1337 = vmatpush1.bf16.xpose.msra.mxu0 0
    %1338 = vmatprep.subr.bf16.mxu0 0
    %1339 = vmatpush1.bf16.xpose.msra.mxu0 0
    %1340 = vmatprep.mubr.bf16.mxu0 0
    %1341 = vmatmul.mubr.bf16.gmra.mrb[0].mxu0 %v1303
    %v1342 = vpop.f32.mrb[0].mxu0
    %v1343 = vadd.f32 0.0, %v1342
    %v1344 = vpop.f32.mrb[0].mxu0
    %v1345 = vpop.f32.mrb[0].mxu0
    %v1346 = vpop.f32.mrb[0].mxu0
    %1347 = vdwg.mxu0
    %v1349 = vsel %vm1071, %v1069, 0
    %v1352 = vsel %vm1071, %v779, 0
    %1354 = vmatprep.subr.bf16.mxu0 0
    %1355 = vmatpush1.bf16.xpose.msra.mxu0 %v1352
    %1356 = vmatprep.subr.bf16.mxu0 0
    %1357 = vmatpush1.bf16.xpose.msra.mxu0 0
    %1358 = vmatprep.subr.bf16.mxu0 0
    %1359 = vmatpush1.bf16.xpose.msra.mxu0 0
    %1360 = vmatprep.subr.bf16.mxu0 0
    %1361 = vmatpush1.bf16.xpose.msra.mxu0 0
    %1362 = vmatprep.subr.bf16.mxu0 0
    %1363 = vmatpush1.bf16.xpose.msra.mxu0 0
    %1364 = vmatprep.subr.bf16.mxu0 0
    %1365 = vmatpush1.bf16.xpose.msra.mxu0 0
    %1366 = vmatprep.subr.bf16.mxu0 0
    %1367 = vmatpush1.bf16.xpose.msra.mxu0 0
    %1368 = vmatprep.subr.bf16.mxu0 0
    %1369 = vmatpush1.bf16.xpose.msra.mxu0 0
    %1370 = vmatprep.subr.bf16.mxu0 0
    %1371 = vmatpush1.bf16.xpose.msra.mxu0 0
    %1372 = vmatprep.subr.bf16.mxu0 0
    %1373 = vmatpush1.bf16.xpose.msra.mxu0 0
    %1374 = vmatprep.subr.bf16.mxu0 0
    %1375 = vmatpush1.bf16.xpose.msra.mxu0 0
    %1376 = vmatprep.subr.bf16.mxu0 0
    %1377 = vmatpush1.bf16.xpose.msra.mxu0 0
    %1378 = vmatprep.subr.bf16.mxu0 0
    %1379 = vmatpush1.bf16.xpose.msra.mxu0 0
    %1380 = vmatprep.subr.bf16.mxu0 0
    %1381 = vmatpush1.bf16.xpose.msra.mxu0 0
    %1382 = vmatprep.subr.bf16.mxu0 0
    %1383 = vmatpush1.bf16.xpose.msra.mxu0 0
    %1384 = vmatprep.subr.bf16.mxu0 0
    %1385 = vmatpush1.bf16.xpose.msra.mxu0 0
    %1386 = vmatprep.mubr.bf16.mxu0 0
    %1387 = vmatmul.mubr.bf16.gmra.mrb[0].mxu0 %v1349
    %v1388 = vpop.f32.mrb[0].mxu0
    %v1389 = vadd.f32 0.0, %v1388
    %v1390 = vpop.f32.mrb[0].mxu0
    %v1391 = vpop.f32.mrb[0].mxu0
    %v1392 = vpop.f32.mrb[0].mxu0
    %1393 = vdwg.mxu0
    %v1395 = vsel %vm1071, %v1070, 0
    %v1398 = vsel %vm1071, %v782, 0
    %1400 = vmatprep.subr.bf16.mxu0 0
    %1401 = vmatpush1.bf16.xpose.msra.mxu0 %v1398
    %1402 = vmatprep.subr.bf16.mxu0 0
    %1403 = vmatpush1.bf16.xpose.msra.mxu0 0
    %1404 = vmatprep.subr.bf16.mxu0 0
    %1405 = vmatpush1.bf16.xpose.msra.mxu0 0
    %1406 = vmatprep.subr.bf16.mxu0 0
    %1407 = vmatpush1.bf16.xpose.msra.mxu0 0
    %1408 = vmatprep.subr.bf16.mxu0 0
    %1409 = vmatpush1.bf16.xpose.msra.mxu0 0
    %1410 = vmatprep.subr.bf16.mxu0 0
    %1411 = vmatpush1.bf16.xpose.msra.mxu0 0
    %1412 = vmatprep.subr.bf16.mxu0 0
    %1413 = vmatpush1.bf16.xpose.msra.mxu0 0
    %1414 = vmatprep.subr.bf16.mxu0 0
    %1415 = vmatpush1.bf16.xpose.msra.mxu0 0
    %1416 = vmatprep.subr.bf16.mxu0 0
    %1417 = vmatpush1.bf16.xpose.msra.mxu0 0
    %1418 = vmatprep.subr.bf16.mxu0 0
    %1419 = vmatpush1.bf16.xpose.msra.mxu0 0
    %1420 = vmatprep.subr.bf16.mxu0 0
    %1421 = vmatpush1.bf16.xpose.msra.mxu0 0
    %1422 = vmatprep.subr.bf16.mxu0 0
    %1423 = vmatpush1.bf16.xpose.msra.mxu0 0
    %1424 = vmatprep.subr.bf16.mxu0 0
    %1425 = vmatpush1.bf16.xpose.msra.mxu0 0
    %1426 = vmatprep.subr.bf16.mxu0 0
    %1427 = vmatpush1.bf16.xpose.msra.mxu0 0
    %1428 = vmatprep.subr.bf16.mxu0 0
    %1429 = vmatpush1.bf16.xpose.msra.mxu0 0
    %1430 = vmatprep.subr.bf16.mxu0 0
    %1431 = vmatpush1.bf16.xpose.msra.mxu0 0
    %1432 = vmatprep.mubr.bf16.mxu0 0
    %1433 = vmatmul.mubr.bf16.gmra.mrb[0].mxu0 %v1395
    %v1434 = vpop.f32.mrb[0].mxu0
    %v1435 = vadd.f32 0.0, %v1434
    %v1436 = vpop.f32.mrb[0].mxu0
    %v1437 = vpop.f32.mrb[0].mxu0
    %v1438 = vpop.f32.mrb[0].mxu0
    %1439 = vdwg.mxu0
    %v1440 = vsel %vm1071, %v1113, -inf
    %1441 = vmax.xlane.f32.xlu0 %v1440
    %v1442 = vpop.xlane.xlu0 %1441
    %v1443 = vsel %vm1071, %v1159, -inf
    %1444 = vmax.xlane.f32.xlu0 %v1443
    %v1445 = vpop.xlane.xlu0 %1444
    %v1446 = vsel %vm1071, %v1205, -inf
    %1447 = vmax.xlane.f32.xlu0 %v1446
    %v1448 = vpop.xlane.xlu0 %1447
    %v1449 = vsel %vm1071, %v1251, -inf
    %1450 = vmax.xlane.f32.xlu0 %v1449
    %v1451 = vpop.xlane.xlu0 %1450
    %v1452 = vsel %vm1071, %v1297, -inf
    %1453 = vmax.xlane.f32.xlu0 %v1452
    %v1454 = vpop.xlane.xlu0 %1453
    %v1455 = vsel %vm1071, %v1343, -inf
    %1456 = vmax.xlane.f32.xlu0 %v1455
    %v1457 = vpop.xlane.xlu0 %1456
    %v1458 = vsel %vm1071, %v1389, -inf
    %1459 = vmax.xlane.f32.xlu0 %v1458
    %v1460 = vpop.xlane.xlu0 %1459
    %v1461 = vsel %vm1071, %v1435, -inf
    %1462 = vmax.xlane.f32.xlu0 %v1461
    %v1463 = vpop.xlane.xlu0 %1462
    %v1464 = vsub.f32 %v1113, %v1442
    %v1465 = vsub.f32 %v1159, %v1445
    %v1466 = vsub.f32 %v1205, %v1448
    %v1467 = vsub.f32 %v1251, %v1451
    %v1468 = vsub.f32 %v1297, %v1454
    %v1469 = vsub.f32 %v1343, %v1457
    %v1470 = vsub.f32 %v1389, %v1460
    %v1471 = vsub.f32 %v1435, %v1463
    %v1472 = vmul.f32 %v1464, 1.442695
    %v1473 = vpow.pop %v1472
    %v1474 = vmul.f32 %v1465, 1.442695
    %v1475 = vpow.pop %v1474
    %v1476 = vmul.f32 %v1466, 1.442695
    %v1477 = vpow.pop %v1476
    %v1478 = vmul.f32 %v1467, 1.442695
    %v1479 = vpow.pop %v1478
    %v1480 = vmul.f32 %v1468, 1.442695
    %v1481 = vpow.pop %v1480
    %v1482 = vmul.f32 %v1469, 1.442695
    %v1483 = vpow.pop %v1482
    %v1484 = vmul.f32 %v1470, 1.442695
    %v1485 = vpow.pop %v1484
    %v1486 = vmul.f32 %v1471, 1.442695
    %v1487 = vpow.pop %v1486
    %v1488 = vsel %vm1071, %v1473, 0.0
    %1489 = vadd.xlane.f32.xlu0 %v1488
    %v1490 = vpop.xlane.xlu0 %1489
    %v1491 = vsel %vm1071, %v1475, 0.0
    %1492 = vadd.xlane.f32.xlu0 %v1491
    %v1493 = vpop.xlane.xlu0 %1492
    %v1494 = vsel %vm1071, %v1477, 0.0
    %1495 = vadd.xlane.f32.xlu0 %v1494
    %v1496 = vpop.xlane.xlu0 %1495
    %v1497 = vsel %vm1071, %v1479, 0.0
    %1498 = vadd.xlane.f32.xlu0 %v1497
    %v1499 = vpop.xlane.xlu0 %1498
    %v1500 = vsel %vm1071, %v1481, 0.0
    %1501 = vadd.xlane.f32.xlu0 %v1500
    %v1502 = vpop.xlane.xlu0 %1501
    %v1503 = vsel %vm1071, %v1483, 0.0
    %1504 = vadd.xlane.f32.xlu0 %v1503
    %v1505 = vpop.xlane.xlu0 %1504
    %v1506 = vsel %vm1071, %v1485, 0.0
    %1507 = vadd.xlane.f32.xlu0 %v1506
    %v1508 = vpop.xlane.xlu0 %1507
    %v1509 = vsel %vm1071, %v1487, 0.0
    %1510 = vadd.xlane.f32.xlu0 %v1509
    %v1511 = vpop.xlane.xlu0 %1510
    %v1512 = vpack.c.bf16 %v1473, %v1473
    %v1513 = vpack.c.bf16 %v1475, %v1475
    %v1514 = vpack.c.bf16 %v1477, %v1477
    %v1515 = vpack.c.bf16 %v1479, %v1479
    %v1516 = vpack.c.bf16 %v1481, %v1481
    %v1517 = vpack.c.bf16 %v1483, %v1483
    %v1518 = vpack.c.bf16 %v1485, %v1485
    %v1519 = vpack.c.bf16 %v1487, %v1487
    %v1521 = vsel %vm1071, %v1512, 0
    %vm1523 = vcmask 1043456
    %v1525 = vsel %vm1523, %v1041, 0
    %1527 = vmatprep.subr.bf16.mxu0 0
    %1528 = vmatpush1.bf16.msra.mxu0 %v1525
    %1529 = vmatprep.subr.bf16.mxu0 0
    %1530 = vmatpush1.bf16.msra.mxu0 0
    %1531 = vmatprep.subr.bf16.mxu0 0
    %1532 = vmatpush1.bf16.msra.mxu0 0
    %1533 = vmatprep.subr.bf16.mxu0 0
    %1534 = vmatpush1.bf16.msra.mxu0 0
    %1535 = vmatprep.subr.bf16.mxu0 0
    %1536 = vmatpush1.bf16.msra.mxu0 0
    %1537 = vmatprep.subr.bf16.mxu0 0
    %1538 = vmatpush1.bf16.msra.mxu0 0
    %1539 = vmatprep.subr.bf16.mxu0 0
    %1540 = vmatpush1.bf16.msra.mxu0 0
    %1541 = vmatprep.subr.bf16.mxu0 0
    %1542 = vmatpush1.bf16.msra.mxu0 0
    %1543 = vmatprep.subr.bf16.mxu0 0
    %1544 = vmatpush1.bf16.msra.mxu0 0
    %1545 = vmatprep.subr.bf16.mxu0 0
    %1546 = vmatpush1.bf16.msra.mxu0 0
    %1547 = vmatprep.subr.bf16.mxu0 0
    %1548 = vmatpush1.bf16.msra.mxu0 0
    %1549 = vmatprep.subr.bf16.mxu0 0
    %1550 = vmatpush1.bf16.msra.mxu0 0
    %1551 = vmatprep.subr.bf16.mxu0 0
    %1552 = vmatpush1.bf16.msra.mxu0 0
    %1553 = vmatprep.subr.bf16.mxu0 0
    %1554 = vmatpush1.bf16.msra.mxu0 0
    %1555 = vmatprep.subr.bf16.mxu0 0
    %1556 = vmatpush1.bf16.msra.mxu0 0
    %1557 = vmatprep.subr.bf16.mxu0 0
    %1558 = vmatpush1.bf16.msra.mxu0 0
    %1559 = vmatprep.mubr.bf16.mxu0 0
    %1560 = vmatmul.mubr.bf16.gmra.mrb[0].mxu0 %v1521
    %v1561 = vpop.f32.mrb[0].mxu0
    %v1562 = vadd.f32 0.0, %v1561
    %v1563 = vpop.f32.mrb[0].mxu0
    %v1564 = vpop.f32.mrb[0].mxu0
    %v1565 = vpop.f32.mrb[0].mxu0
    %1566 = vdwg.mxu0
    %v1568 = vsel %vm1071, %v1513, 0
    %v1571 = vsel %vm1523, %v1044, 0
    %1573 = vmatprep.subr.bf16.mxu0 0
    %1574 = vmatpush1.bf16.msra.mxu0 %v1571
    %1575 = vmatprep.subr.bf16.mxu0 0
    %1576 = vmatpush1.bf16.msra.mxu0 0
    %1577 = vmatprep.subr.bf16.mxu0 0
    %1578 = vmatpush1.bf16.msra.mxu0 0
    %1579 = vmatprep.subr.bf16.mxu0 0
    %1580 = vmatpush1.bf16.msra.mxu0 0
    %1581 = vmatprep.subr.bf16.mxu0 0
    %1582 = vmatpush1.bf16.msra.mxu0 0
    %1583 = vmatprep.subr.bf16.mxu0 0
    %1584 = vmatpush1.bf16.msra.mxu0 0
    %1585 = vmatprep.subr.bf16.mxu0 0
    %1586 = vmatpush1.bf16.msra.mxu0 0
    %1587 = vmatprep.subr.bf16.mxu0 0
    %1588 = vmatpush1.bf16.msra.mxu0 0
    %1589 = vmatprep.subr.bf16.mxu0 0
    %1590 = vmatpush1.bf16.msra.mxu0 0
    %1591 = vmatprep.subr.bf16.mxu0 0
    %1592 = vmatpush1.bf16.msra.mxu0 0
    %1593 = vmatprep.subr.bf16.mxu0 0
    %1594 = vmatpush1.bf16.msra.mxu0 0
    %1595 = vmatprep.subr.bf16.mxu0 0
    %1596 = vmatpush1.bf16.msra.mxu0 0
    %1597 = vmatprep.subr.bf16.mxu0 0
    %1598 = vmatpush1.bf16.msra.mxu0 0
    %1599 = vmatprep.subr.bf16.mxu0 0
    %1600 = vmatpush1.bf16.msra.mxu0 0
    %1601 = vmatprep.subr.bf16.mxu0 0
    %1602 = vmatpush1.bf16.msra.mxu0 0
    %1603 = vmatprep.subr.bf16.mxu0 0
    %1604 = vmatpush1.bf16.msra.mxu0 0
    %1605 = vmatprep.mubr.bf16.mxu0 0
    %1606 = vmatmul.mubr.bf16.gmra.mrb[0].mxu0 %v1568
    %v1607 = vpop.f32.mrb[0].mxu0
    %v1608 = vadd.f32 0.0, %v1607
    %v1609 = vpop.f32.mrb[0].mxu0
    %v1610 = vpop.f32.mrb[0].mxu0
    %v1611 = vpop.f32.mrb[0].mxu0
    %1612 = vdwg.mxu0
    %v1614 = vsel %vm1071, %v1514, 0
    %v1617 = vsel %vm1523, %v1047, 0
    %1619 = vmatprep.subr.bf16.mxu0 0
    %1620 = vmatpush1.bf16.msra.mxu0 %v1617
    %1621 = vmatprep.subr.bf16.mxu0 0
    %1622 = vmatpush1.bf16.msra.mxu0 0
    %1623 = vmatprep.subr.bf16.mxu0 0
    %1624 = vmatpush1.bf16.msra.mxu0 0
    %1625 = vmatprep.subr.bf16.mxu0 0
    %1626 = vmatpush1.bf16.msra.mxu0 0
    %1627 = vmatprep.subr.bf16.mxu0 0
    %1628 = vmatpush1.bf16.msra.mxu0 0
    %1629 = vmatprep.subr.bf16.mxu0 0
    %1630 = vmatpush1.bf16.msra.mxu0 0
    %1631 = vmatprep.subr.bf16.mxu0 0
    %1632 = vmatpush1.bf16.msra.mxu0 0
    %1633 = vmatprep.subr.bf16.mxu0 0
    %1634 = vmatpush1.bf16.msra.mxu0 0
    %1635 = vmatprep.subr.bf16.mxu0 0
    %1636 = vmatpush1.bf16.msra.mxu0 0
    %1637 = vmatprep.subr.bf16.mxu0 0
    %1638 = vmatpush1.bf16.msra.mxu0 0
    %1639 = vmatprep.subr.bf16.mxu0 0
    %1640 = vmatpush1.bf16.msra.mxu0 0
    %1641 = vmatprep.subr.bf16.mxu0 0
    %1642 = vmatpush1.bf16.msra.mxu0 0
    %1643 = vmatprep.subr.bf16.mxu0 0
    %1644 = vmatpush1.bf16.msra.mxu0 0
    %1645 = vmatprep.subr.bf16.mxu0 0
    %1646 = vmatpush1.bf16.msra.mxu0 0
    %1647 = vmatprep.subr.bf16.mxu0 0
    %1648 = vmatpush1.bf16.msra.mxu0 0
    %1649 = vmatprep.subr.bf16.mxu0 0
    %1650 = vmatpush1.bf16.msra.mxu0 0
    %1651 = vmatprep.mubr.bf16.mxu0 0
    %1652 = vmatmul.mubr.bf16.gmra.mrb[0].mxu0 %v1614
    %v1653 = vpop.f32.mrb[0].mxu0
    %v1654 = vadd.f32 0.0, %v1653
    %v1655 = vpop.f32.mrb[0].mxu0
    %v1656 = vpop.f32.mrb[0].mxu0
    %v1657 = vpop.f32.mrb[0].mxu0
    %1658 = vdwg.mxu0
    %v1660 = vsel %vm1071, %v1515, 0
    %v1663 = vsel %vm1523, %v1050, 0
    %1665 = vmatprep.subr.bf16.mxu0 0
    %1666 = vmatpush1.bf16.msra.mxu0 %v1663
    %1667 = vmatprep.subr.bf16.mxu0 0
    %1668 = vmatpush1.bf16.msra.mxu0 0
    %1669 = vmatprep.subr.bf16.mxu0 0
    %1670 = vmatpush1.bf16.msra.mxu0 0
    %1671 = vmatprep.subr.bf16.mxu0 0
    %1672 = vmatpush1.bf16.msra.mxu0 0
    %1673 = vmatprep.subr.bf16.mxu0 0
    %1674 = vmatpush1.bf16.msra.mxu0 0
    %1675 = vmatprep.subr.bf16.mxu0 0
    %1676 = vmatpush1.bf16.msra.mxu0 0
    %1677 = vmatprep.subr.bf16.mxu0 0
    %1678 = vmatpush1.bf16.msra.mxu0 0
    %1679 = vmatprep.subr.bf16.mxu0 0
    %1680 = vmatpush1.bf16.msra.mxu0 0
    %1681 = vmatprep.subr.bf16.mxu0 0
    %1682 = vmatpush1.bf16.msra.mxu0 0
    %1683 = vmatprep.subr.bf16.mxu0 0
    %1684 = vmatpush1.bf16.msra.mxu0 0
    %1685 = vmatprep.subr.bf16.mxu0 0
    %1686 = vmatpush1.bf16.msra.mxu0 0
    %1687 = vmatprep.subr.bf16.mxu0 0
    %1688 = vmatpush1.bf16.msra.mxu0 0
    %1689 = vmatprep.subr.bf16.mxu0 0
    %1690 = vmatpush1.bf16.msra.mxu0 0
    %1691 = vmatprep.subr.bf16.mxu0 0
    %1692 = vmatpush1.bf16.msra.mxu0 0
    %1693 = vmatprep.subr.bf16.mxu0 0
    %1694 = vmatpush1.bf16.msra.mxu0 0
    %1695 = vmatprep.subr.bf16.mxu0 0
    %1696 = vmatpush1.bf16.msra.mxu0 0
    %1697 = vmatprep.mubr.bf16.mxu0 0
    %1698 = vmatmul.mubr.bf16.gmra.mrb[0].mxu0 %v1660
    %v1699 = vpop.f32.mrb[0].mxu0
    %v1700 = vadd.f32 0.0, %v1699
    %v1701 = vpop.f32.mrb[0].mxu0
    %v1702 = vpop.f32.mrb[0].mxu0
    %v1703 = vpop.f32.mrb[0].mxu0
    %1704 = vdwg.mxu0
    %v1706 = vsel %vm1071, %v1516, 0
    %v1709 = vsel %vm1523, %v1053, 0
    %1711 = vmatprep.subr.bf16.mxu0 0
    %1712 = vmatpush1.bf16.msra.mxu0 %v1709
    %1713 = vmatprep.subr.bf16.mxu0 0
    %1714 = vmatpush1.bf16.msra.mxu0 0
    %1715 = vmatprep.subr.bf16.mxu0 0
    %1716 = vmatpush1.bf16.msra.mxu0 0
    %1717 = vmatprep.subr.bf16.mxu0 0
    %1718 = vmatpush1.bf16.msra.mxu0 0
    %1719 = vmatprep.subr.bf16.mxu0 0
    %1720 = vmatpush1.bf16.msra.mxu0 0
    %1721 = vmatprep.subr.bf16.mxu0 0
    %1722 = vmatpush1.bf16.msra.mxu0 0
    %1723 = vmatprep.subr.bf16.mxu0 0
    %1724 = vmatpush1.bf16.msra.mxu0 0
    %1725 = vmatprep.subr.bf16.mxu0 0
    %1726 = vmatpush1.bf16.msra.mxu0 0
    %1727 = vmatprep.subr.bf16.mxu0 0
    %1728 = vmatpush1.bf16.msra.mxu0 0
    %1729 = vmatprep.subr.bf16.mxu0 0
    %1730 = vmatpush1.bf16.msra.mxu0 0
    %1731 = vmatprep.subr.bf16.mxu0 0
    %1732 = vmatpush1.bf16.msra.mxu0 0
    %1733 = vmatprep.subr.bf16.mxu0 0
    %1734 = vmatpush1.bf16.msra.mxu0 0
    %1735 = vmatprep.subr.bf16.mxu0 0
    %1736 = vmatpush1.bf16.msra.mxu0 0
    %1737 = vmatprep.subr.bf16.mxu0 0
    %1738 = vmatpush1.bf16.msra.mxu0 0
    %1739 = vmatprep.subr.bf16.mxu0 0
    %1740 = vmatpush1.bf16.msra.mxu0 0
    %1741 = vmatprep.subr.bf16.mxu0 0
    %1742 = vmatpush1.bf16.msra.mxu0 0
    %1743 = vmatprep.mubr.bf16.mxu0 0
    %1744 = vmatmul.mubr.bf16.gmra.mrb[0].mxu0 %v1706
    %v1745 = vpop.f32.mrb[0].mxu0
    %v1746 = vadd.f32 0.0, %v1745
    %v1747 = vpop.f32.mrb[0].mxu0
    %v1748 = vpop.f32.mrb[0].mxu0
    %v1749 = vpop.f32.mrb[0].mxu0
    %1750 = vdwg.mxu0
    %v1752 = vsel %vm1071, %v1517, 0
    %v1755 = vsel %vm1523, %v1056, 0
    %1757 = vmatprep.subr.bf16.mxu0 0
    %1758 = vmatpush1.bf16.msra.mxu0 %v1755
    %1759 = vmatprep.subr.bf16.mxu0 0
    %1760 = vmatpush1.bf16.msra.mxu0 0
    %1761 = vmatprep.subr.bf16.mxu0 0
    %1762 = vmatpush1.bf16.msra.mxu0 0
    %1763 = vmatprep.subr.bf16.mxu0 0
    %1764 = vmatpush1.bf16.msra.mxu0 0
    %1765 = vmatprep.subr.bf16.mxu0 0
    %1766 = vmatpush1.bf16.msra.mxu0 0
    %1767 = vmatprep.subr.bf16.mxu0 0
    %1768 = vmatpush1.bf16.msra.mxu0 0
    %1769 = vmatprep.subr.bf16.mxu0 0
    %1770 = vmatpush1.bf16.msra.mxu0 0
    %1771 = vmatprep.subr.bf16.mxu0 0
    %1772 = vmatpush1.bf16.msra.mxu0 0
    %1773 = vmatprep.subr.bf16.mxu0 0
    %1774 = vmatpush1.bf16.msra.mxu0 0
    %1775 = vmatprep.subr.bf16.mxu0 0
    %1776 = vmatpush1.bf16.msra.mxu0 0
    %1777 = vmatprep.subr.bf16.mxu0 0
    %1778 = vmatpush1.bf16.msra.mxu0 0
    %1779 = vmatprep.subr.bf16.mxu0 0
    %1780 = vmatpush1.bf16.msra.mxu0 0
    %1781 = vmatprep.subr.bf16.mxu0 0
    %1782 = vmatpush1.bf16.msra.mxu0 0
    %1783 = vmatprep.subr.bf16.mxu0 0
    %1784 = vmatpush1.bf16.msra.mxu0 0
    %1785 = vmatprep.subr.bf16.mxu0 0
    %1786 = vmatpush1.bf16.msra.mxu0 0
    %1787 = vmatprep.subr.bf16.mxu0 0
    %1788 = vmatpush1.bf16.msra.mxu0 0
    %1789 = vmatprep.mubr.bf16.mxu0 0
    %1790 = vmatmul.mubr.bf16.gmra.mrb[0].mxu0 %v1752
    %v1791 = vpop.f32.mrb[0].mxu0
    %v1792 = vadd.f32 0.0, %v1791
    %v1793 = vpop.f32.mrb[0].mxu0
    %v1794 = vpop.f32.mrb[0].mxu0
    %v1795 = vpop.f32.mrb[0].mxu0
    %1796 = vdwg.mxu0
    %v1798 = vsel %vm1071, %v1518, 0
    %v1801 = vsel %vm1523, %v1059, 0
    %1803 = vmatprep.subr.bf16.mxu0 0
    %1804 = vmatpush1.bf16.msra.mxu0 %v1801
    %1805 = vmatprep.subr.bf16.mxu0 0
    %1806 = vmatpush1.bf16.msra.mxu0 0
    %1807 = vmatprep.subr.bf16.mxu0 0
    %1808 = vmatpush1.bf16.msra.mxu0 0
    %1809 = vmatprep.subr.bf16.mxu0 0
    %1810 = vmatpush1.bf16.msra.mxu0 0
    %1811 = vmatprep.subr.bf16.mxu0 0
    %1812 = vmatpush1.bf16.msra.mxu0 0
    %1813 = vmatprep.subr.bf16.mxu0 0
    %1814 = vmatpush1.bf16.msra.mxu0 0
    %1815 = vmatprep.subr.bf16.mxu0 0
    %1816 = vmatpush1.bf16.msra.mxu0 0
    %1817 = vmatprep.subr.bf16.mxu0 0
    %1818 = vmatpush1.bf16.msra.mxu0 0
    %1819 = vmatprep.subr.bf16.mxu0 0
    %1820 = vmatpush1.bf16.msra.mxu0 0
    %1821 = vmatprep.subr.bf16.mxu0 0
    %1822 = vmatpush1.bf16.msra.mxu0 0
    %1823 = vmatprep.subr.bf16.mxu0 0
    %1824 = vmatpush1.bf16.msra.mxu0 0
    %1825 = vmatprep.subr.bf16.mxu0 0
    %1826 = vmatpush1.bf16.msra.mxu0 0
    %1827 = vmatprep.subr.bf16.mxu0 0
    %1828 = vmatpush1.bf16.msra.mxu0 0
    %1829 = vmatprep.subr.bf16.mxu0 0
    %1830 = vmatpush1.bf16.msra.mxu0 0
    %1831 = vmatprep.subr.bf16.mxu0 0
    %1832 = vmatpush1.bf16.msra.mxu0 0
    %1833 = vmatprep.subr.bf16.mxu0 0
    %1834 = vmatpush1.bf16.msra.mxu0 0
    %1835 = vmatprep.mubr.bf16.mxu0 0
    %1836 = vmatmul.mubr.bf16.gmra.mrb[0].mxu0 %v1798
    %v1837 = vpop.f32.mrb[0].mxu0
    %v1838 = vadd.f32 0.0, %v1837
    %v1839 = vpop.f32.mrb[0].mxu0
    %v1840 = vpop.f32.mrb[0].mxu0
    %v1841 = vpop.f32.mrb[0].mxu0
    %1842 = vdwg.mxu0
    %v1844 = vsel %vm1071, %v1519, 0
    %v1847 = vsel %vm1523, %v1062, 0
    %1849 = vmatprep.subr.bf16.mxu0 0
    %1850 = vmatpush1.bf16.msra.mxu0 %v1847
    %1851 = vmatprep.subr.bf16.mxu0 0
    %1852 = vmatpush1.bf16.msra.mxu0 0
    %1853 = vmatprep.subr.bf16.mxu0 0
    %1854 = vmatpush1.bf16.msra.mxu0 0
    %1855 = vmatprep.subr.bf16.mxu0 0
    %1856 = vmatpush1.bf16.msra.mxu0 0
    %1857 = vmatprep.subr.bf16.mxu0 0
    %1858 = vmatpush1.bf16.msra.mxu0 0
    %1859 = vmatprep.subr.bf16.mxu0 0
    %1860 = vmatpush1.bf16.msra.mxu0 0
    %1861 = vmatprep.subr.bf16.mxu0 0
    %1862 = vmatpush1.bf16.msra.mxu0 0
    %1863 = vmatprep.subr.bf16.mxu0 0
    %1864 = vmatpush1.bf16.msra.mxu0 0
    %1865 = vmatprep.subr.bf16.mxu0 0
    %1866 = vmatpush1.bf16.msra.mxu0 0
    %1867 = vmatprep.subr.bf16.mxu0 0
    %1868 = vmatpush1.bf16.msra.mxu0 0
    %1869 = vmatprep.subr.bf16.mxu0 0
    %1870 = vmatpush1.bf16.msra.mxu0 0
    %1871 = vmatprep.subr.bf16.mxu0 0
    %1872 = vmatpush1.bf16.msra.mxu0 0
    %1873 = vmatprep.subr.bf16.mxu0 0
    %1874 = vmatpush1.bf16.msra.mxu0 0
    %1875 = vmatprep.subr.bf16.mxu0 0
    %1876 = vmatpush1.bf16.msra.mxu0 0
    %1877 = vmatprep.subr.bf16.mxu0 0
    %1878 = vmatpush1.bf16.msra.mxu0 0
    %1879 = vmatprep.subr.bf16.mxu0 0
    %1880 = vmatpush1.bf16.msra.mxu0 0
    %1881 = vmatprep.mubr.bf16.mxu0 0
    %1882 = vmatmul.mubr.bf16.gmra.mrb[0].mxu0 %v1844
    %v1883 = vpop.f32.mrb[0].mxu0
    %v1884 = vadd.f32 0.0, %v1883
    %v1885 = vpop.f32.mrb[0].mxu0
    %v1886 = vpop.f32.mrb[0].mxu0
    %v1887 = vpop.f32.mrb[0].mxu0
    %1888 = vdwg.mxu0
    %v1889 = vrcp.pop %v1490
    %v1890 = vrcp.pop %v1493
    %v1891 = vrcp.pop %v1496
    %v1892 = vrcp.pop %v1499
    %v1893 = vrcp.pop %v1502
    %v1894 = vrcp.pop %v1505
    %v1895 = vrcp.pop %v1508
    %v1896 = vrcp.pop %v1511
    %v1897 = vmul.f32 %v1562, %v1889
    %v1898 = vmul.f32 %v1608, %v1890
    %v1899 = vmul.f32 %v1654, %v1891
    %v1900 = vmul.f32 %v1700, %v1892
    %v1901 = vmul.f32 %v1746, %v1893
    %v1902 = vmul.f32 %v1792, %v1894
    %v1903 = vmul.f32 %v1838, %v1895
    %v1904 = vmul.f32 %v1884, %v1896
    %v1905 = vpack.c.bf16 %v1897, %v1897
    %v1907 = vunpack.c.l.s4 1983009808
    %v1908 = vunpack.c.0.s8 %v1907
    %v1909 = vlaneseq
    %v1910 = vshrl.u32 %v1909, 7
    %v1911 = vsub.s32 %v1908, %v1910
    %v1912 = vrot.slane %v1905, %v1911
    %v1913 = vpack.c.bf16 %v1899, %v1899
    %v1915 = vunpack.c.l.s4 1983009808
    %v1916 = vunpack.c.0.s8 %v1915
    %v1917 = vlaneseq
    %v1918 = vshrl.u32 %v1917, 7
    %v1919 = vsub.s32 %v1916, %v1918
    %v1920 = vrot.slane %v1913, %v1919
    %v1921 = vcombine.low %v1912, %v1920
    %v1922 = vcombine.high %v1912, %v1920
    %v1924 = vunpack.c.l.s4 1934713408
    %v1925 = vunpack.c.0.s8 %v1924
    %v1926 = vlaneseq
    %v1927 = vshrl.u32 %v1926, 7
    %v1928 = vsub.s32 %v1925, %v1927
    %v1929 = vrot.slane %v1921, %v1928
    %v1931 = vunpack.c.l.s4 1934713408
    %v1932 = vunpack.c.0.s8 %v1931
    %v1933 = vlaneseq
    %v1934 = vshrl.u32 %v1933, 7
    %v1935 = vsub.s32 %v1932, %v1934
    %v1936 = vrot.slane %v1922, %v1935
    %v1937 = vcombine.high %v1929, 0
    %v1938 = vcombine.high %v1936, 0
    %v1939 = vpack.c.bf16 %v1898, %v1898
    %v1941 = vunpack.c.l.s4 1983009808
    %v1942 = vunpack.c.0.s8 %v1941
    %v1943 = vlaneseq
    %v1944 = vshrl.u32 %v1943, 7
    %v1945 = vsub.s32 %v1942, %v1944
    %v1946 = vrot.slane %v1939, %v1945
    %v1947 = vpack.c.bf16 %v1900, %v1900
    %v1949 = vunpack.c.l.s4 1983009808
    %v1950 = vunpack.c.0.s8 %v1949
    %v1951 = vlaneseq
    %v1952 = vshrl.u32 %v1951, 7
    %v1953 = vsub.s32 %v1950, %v1952
    %v1954 = vrot.slane %v1947, %v1953
    %v1955 = vcombine.low %v1946, %v1954
    %v1956 = vcombine.high %v1946, %v1954
    %v1958 = vunpack.c.l.s4 1934713408
    %v1959 = vunpack.c.0.s8 %v1958
    %v1960 = vlaneseq
    %v1961 = vshrl.u32 %v1960, 7
    %v1962 = vsub.s32 %v1959, %v1961
    %v1963 = vrot.slane %v1955, %v1962
    %v1965 = vunpack.c.l.s4 1934713408
    %v1966 = vunpack.c.0.s8 %v1965
    %v1967 = vlaneseq
    %v1968 = vshrl.u32 %v1967, 7
    %v1969 = vsub.s32 %v1966, %v1968
    %v1970 = vrot.slane %v1956, %v1969
    %v1971 = vcombine.high %v1963, 0
    %v1972 = vcombine.high %v1970, 0
    %v1973 = vpack.c.bf16 %v1901, %v1901
    %v1975 = vunpack.c.l.s4 1983009808
    %v1976 = vunpack.c.0.s8 %v1975
    %v1977 = vlaneseq
    %v1978 = vshrl.u32 %v1977, 7
    %v1979 = vsub.s32 %v1976, %v1978
    %v1980 = vrot.slane %v1973, %v1979
    %v1981 = vpack.c.bf16 %v1903, %v1903
    %v1983 = vunpack.c.l.s4 1983009808
    %v1984 = vunpack.c.0.s8 %v1983
    %v1985 = vlaneseq
    %v1986 = vshrl.u32 %v1985, 7
    %v1987 = vsub.s32 %v1984, %v1986
    %v1988 = vrot.slane %v1981, %v1987
    %v1989 = vcombine.low %v1980, %v1988
    %v1990 = vcombine.high %v1980, %v1988
    %v1992 = vunpack.c.l.s4 1934713408
    %v1993 = vunpack.c.0.s8 %v1992
    %v1994 = vlaneseq
    %v1995 = vshrl.u32 %v1994, 7
    %v1996 = vsub.s32 %v1993, %v1995
    %v1997 = vrot.slane %v1989, %v1996
    %v1999 = vunpack.c.l.s4 1934713408
    %v2000 = vunpack.c.0.s8 %v1999
    %v2001 = vlaneseq
    %v2002 = vshrl.u32 %v2001, 7
    %v2003 = vsub.s32 %v2000, %v2002
    %v2004 = vrot.slane %v1990, %v2003
    %v2005 = vcombine.high %v1997, 0
    %v2006 = vcombine.high %v2004, 0
    %v2007 = vpack.c.bf16 %v1902, %v1902
    %v2009 = vunpack.c.l.s4 1983009808
    %v2010 = vunpack.c.0.s8 %v2009
    %v2011 = vlaneseq
    %v2012 = vshrl.u32 %v2011, 7
    %v2013 = vsub.s32 %v2010, %v2012
    %v2014 = vrot.slane %v2007, %v2013
    %v2015 = vpack.c.bf16 %v1904, %v1904
    %v2017 = vunpack.c.l.s4 1983009808
    %v2018 = vunpack.c.0.s8 %v2017
    %v2019 = vlaneseq
    %v2020 = vshrl.u32 %v2019, 7
    %v2021 = vsub.s32 %v2018, %v2020
    %v2022 = vrot.slane %v2015, %v2021
    %v2023 = vcombine.low %v2014, %v2022
    %v2024 = vcombine.high %v2014, %v2022
    %v2026 = vunpack.c.l.s4 1934713408
    %v2027 = vunpack.c.0.s8 %v2026
    %v2028 = vlaneseq
    %v2029 = vshrl.u32 %v2028, 7
    %v2030 = vsub.s32 %v2027, %v2029
    %v2031 = vrot.slane %v2023, %v2030
    %v2033 = vunpack.c.l.s4 1934713408
    %v2034 = vunpack.c.0.s8 %v2033
    %v2035 = vlaneseq
    %v2036 = vshrl.u32 %v2035, 7
    %v2037 = vsub.s32 %v2034, %v2036
    %v2038 = vrot.slane %v2024, %v2037
    %v2039 = vcombine.high %v2031, 0
    %v2040 = vcombine.high %v2038, 0
    %v2043 = vpack.i.b16 %v1963, %v1929
    %v2045 = vshrl.u32 %v1929, 16
    %v2046 = vshrl.u32 %v1963, 16
    %v2047 = vpack.i.b16 %v2046, %v2045
    %v2051 = vpack.i.b16 %v1971, %v1937
    %v2053 = vshrl.u32 %v1937, 16
    %v2054 = vshrl.u32 %v1971, 16
    %v2055 = vpack.i.b16 %v2054, %v2053
    %v2059 = vpack.i.b16 %v1970, %v1936
    %v2061 = vshrl.u32 %v1936, 16
    %v2062 = vshrl.u32 %v1970, 16
    %v2063 = vpack.i.b16 %v2062, %v2061
    %v2067 = vpack.i.b16 %v1972, %v1938
    %v2069 = vshrl.u32 %v1938, 16
    %v2070 = vshrl.u32 %v1972, 16
    %v2071 = vpack.i.b16 %v2070, %v2069
    %v2075 = vpack.i.b16 %v2031, %v1997
    %v2077 = vshrl.u32 %v1997, 16
    %v2078 = vshrl.u32 %v2031, 16
    %v2079 = vpack.i.b16 %v2078, %v2077
    %v2083 = vpack.i.b16 %v2039, %v2005
    %v2085 = vshrl.u32 %v2005, 16
    %v2086 = vshrl.u32 %v2039, 16
    %v2087 = vpack.i.b16 %v2086, %v2085
    %v2091 = vpack.i.b16 %v2038, %v2004
    %v2093 = vshrl.u32 %v2004, 16
    %v2094 = vshrl.u32 %v2038, 16
    %v2095 = vpack.i.b16 %v2094, %v2093
    %v2099 = vpack.i.b16 %v2040, %v2006
    %v2101 = vshrl.u32 %v2006, 16
    %v2102 = vshrl.u32 %v2040, 16
    %v2103 = vpack.i.b16 %v2102, %v2101
    %v2105 = vcombine.low %v2043, %v2059
    %v2107 = vunpack.c.l.s4 1983009808
    %v2108 = vunpack.c.0.s8 %v2107
    %v2109 = vlaneseq
    %v2110 = vshrl.u32 %v2109, 7
    %v2111 = vsub.s32 %v2108, %v2110
    %v2112 = vrot.slane %v2105, %v2111
    %v2113 = vcombine.low %v2051, %v2067
    %v2115 = vunpack.c.l.s4 1983009808
    %v2116 = vunpack.c.0.s8 %v2115
    %v2117 = vlaneseq
    %v2118 = vshrl.u32 %v2117, 7
    %v2119 = vsub.s32 %v2116, %v2118
    %v2120 = vrot.slane %v2113, %v2119
    %v2121 = vcombine.low %v2112, %v2120
    %v2123 = vunpack.c.l.s4 1934713408
    %v2124 = vunpack.c.0.s8 %v2123
    %v2125 = vlaneseq
    %v2126 = vshrl.u32 %v2125, 7
    %v2127 = vsub.s32 %v2124, %v2126
    %v2128 = vrot.slane %v2121, %v2127
    %v2129 = vcombine.high %v2128, 0
    %v2130 = vcombine.low %v2047, %v2063
    %v2132 = vunpack.c.l.s4 1983009808
    %v2133 = vunpack.c.0.s8 %v2132
    %v2134 = vlaneseq
    %v2135 = vshrl.u32 %v2134, 7
    %v2136 = vsub.s32 %v2133, %v2135
    %v2137 = vrot.slane %v2130, %v2136
    %v2138 = vcombine.low %v2055, %v2071
    %v2140 = vunpack.c.l.s4 1983009808
    %v2141 = vunpack.c.0.s8 %v2140
    %v2142 = vlaneseq
    %v2143 = vshrl.u32 %v2142, 7
    %v2144 = vsub.s32 %v2141, %v2143
    %v2145 = vrot.slane %v2138, %v2144
    %v2146 = vcombine.low %v2137, %v2145
    %v2148 = vunpack.c.l.s4 1934713408
    %v2149 = vunpack.c.0.s8 %v2148
    %v2150 = vlaneseq
    %v2151 = vshrl.u32 %v2150, 7
    %v2152 = vsub.s32 %v2149, %v2151
    %v2153 = vrot.slane %v2146, %v2152
    %v2154 = vcombine.high %v2153, 0
    %v2155 = vcombine.low %v2075, %v2091
    %v2157 = vunpack.c.l.s4 1983009808
    %v2158 = vunpack.c.0.s8 %v2157
    %v2159 = vlaneseq
    %v2160 = vshrl.u32 %v2159, 7
    %v2161 = vsub.s32 %v2158, %v2160
    %v2162 = vrot.slane %v2155, %v2161
    %v2163 = vcombine.low %v2083, %v2099
    %v2165 = vunpack.c.l.s4 1983009808
    %v2166 = vunpack.c.0.s8 %v2165
    %v2167 = vlaneseq
    %v2168 = vshrl.u32 %v2167, 7
    %v2169 = vsub.s32 %v2166, %v2168
    %v2170 = vrot.slane %v2163, %v2169
    %v2171 = vcombine.low %v2162, %v2170
    %v2173 = vunpack.c.l.s4 1934713408
    %v2174 = vunpack.c.0.s8 %v2173
    %v2175 = vlaneseq
    %v2176 = vshrl.u32 %v2175, 7
    %v2177 = vsub.s32 %v2174, %v2176
    %v2178 = vrot.slane %v2171, %v2177
    %v2179 = vcombine.high %v2178, 0
    %v2180 = vcombine.low %v2079, %v2095
    %v2182 = vunpack.c.l.s4 1983009808
    %v2183 = vunpack.c.0.s8 %v2182
    %v2184 = vlaneseq
    %v2185 = vshrl.u32 %v2184, 7
    %v2186 = vsub.s32 %v2183, %v2185
    %v2187 = vrot.slane %v2180, %v2186
    %v2188 = vcombine.low %v2087, %v2103
    %v2190 = vunpack.c.l.s4 1983009808
    %v2191 = vunpack.c.0.s8 %v2190
    %v2192 = vlaneseq
    %v2193 = vshrl.u32 %v2192, 7
    %v2194 = vsub.s32 %v2191, %v2193
    %v2195 = vrot.slane %v2188, %v2194
    %v2196 = vcombine.low %v2187, %v2195
    %v2198 = vunpack.c.l.s4 1934713408
    %v2199 = vunpack.c.0.s8 %v2198
    %v2200 = vlaneseq
    %v2201 = vshrl.u32 %v2200, 7
    %v2202 = vsub.s32 %v2199, %v2201
    %v2203 = vrot.slane %v2196, %v2202
    %v2204 = vcombine.high %v2203, 0
    %v2207 = vpack.i.b16 %v2153, %v2128
    %v2208 = vshrl.u32 %v2128, 16
    %v2209 = vshrl.u32 %v2153, 16
    %v2210 = vpack.i.b16 %v2209, %v2208
    %v2213 = vpack.i.b16 %v2154, %v2129
    %v2214 = vshrl.u32 %v2129, 16
    %v2215 = vshrl.u32 %v2154, 16
    %v2216 = vpack.i.b16 %v2215, %v2214
    %v2219 = vpack.i.b16 %v2203, %v2178
    %v2220 = vshrl.u32 %v2178, 16
    %v2221 = vshrl.u32 %v2203, 16
    %v2222 = vpack.i.b16 %v2221, %v2220
    %v2225 = vpack.i.b16 %v2204, %v2179
    %v2226 = vshrl.u32 %v2179, 16
    %v2227 = vshrl.u32 %v2204, 16
    %v2228 = vpack.i.b16 %v2227, %v2226
    %2229 = vrot.lane.b32.xlu0 %v2210, 8
    %v2230 = vpop.permute.xlu0 %2229
    %2231 = vrot.lane.b32.xlu0 %v2222, 8
    %v2232 = vpop.permute.xlu0 %2231
    %2233 = vrot.lane.b32.xlu0 %v2213, 16
    %v2234 = vpop.permute.xlu0 %2233
    %2235 = vrot.lane.b32.xlu0 %v2225, 16
    %v2236 = vpop.permute.xlu0 %2235
    %2237 = vrot.lane.b32.xlu0 %v2216, 24
    %v2238 = vpop.permute.xlu0 %2237
    %2239 = vrot.lane.b32.xlu0 %v2228, 24
    %v2240 = vpop.permute.xlu0 %2239
    %v2243 = vsel %vm1071, %v2207, %v2230
    %v2246 = vsel %vm1071, %v2219, %v2232
    %vm2247 = vcmask 130048
    %v2249 = vsel %vm2247, %v2243, %v2234
    %v2251 = vsel %vm2247, %v2246, %v2236
    %vm2252 = vcmask 195584
    %v2254 = vsel %vm2252, %v2249, %v2238
    %v2257 = vsel %vm2252, %v2251, %v2240
    %vm2259 = vcmask 257024
    %2260 = vst.msk [vmem:[#allocation3] sm:$0xf] %vm2259, %v2254
    %2261 = vst.msk [vmem:[#allocation3 + $0x4] sm:$0xf] %vm2259, %v2257
    %v2262 = vld [vmem:[#allocation3] sm:$0xf]
    %v2263 = vld [vmem:[#allocation3 + $0x4] sm:$0xf]
    %v2264 = vld [vmem:[%s6] sm:$0xf]
    %v2265 = vld [vmem:[%s6 + $0x4] sm:$0xf]
    %v2266 = vld [vmem:[%s6 + $0x8] sm:$0xf]
    %v2267 = vld [vmem:[%s6 + $0xc] sm:$0xf]
    %v2268 = vld [vmem:[%s7] sm:$0x1]
    %v2270 = vlaneseq
    %v2271 = vshrl.u32 %v2270, 7
    %v2272 = vsub.s32 0, %v2271
    %v2273 = vrot.slane %v2268, %v2272
    %v2277 = vunpack.c.l.b16 %v2262
    %v2278 = vunpack.c.l.b16 %v2263
    %v2279 = vpack.c.b16 %v2278, %v2277
    %v2284 = vunpack.c.l.b16 %v2264
    %v2285 = vunpack.c.l.b16 %v2265
    %v2286 = vunpack.c.l.b16 %v2266
    %v2287 = vunpack.c.l.b16 %v2267
    %v2288 = vpack.c.b16 %v2285, %v2284
    %v2289 = vpack.c.b16 %v2287, %v2286
    %vm2292 = vcmask 261120
    %v2294 = vsel %vm2292, %v2279, 0
    %2296 = vmatprep.subr.bf16.mxu0 0
    %2297 = vmatpush1.bf16.msra.mxu0 %v2288
    %2298 = vmatprep.subr.bf16.mxu0 0
    %2299 = vmatpush1.bf16.msra.mxu0 %v2289
    %2300 = vmatprep.subr.bf16.mxu0 0
    %2301 = vmatpush1.bf16.msra.mxu0 0
    %2302 = vmatprep.subr.bf16.mxu0 0
    %2303 = vmatpush1.bf16.msra.mxu0 0
    %2304 = vmatprep.subr.bf16.mxu0 0
    %2305 = vmatpush1.bf16.msra.mxu0 0
    %2306 = vmatprep.subr.bf16.mxu0 0
    %2307 = vmatpush1.bf16.msra.mxu0 0
    %2308 = vmatprep.subr.bf16.mxu0 0
    %2309 = vmatpush1.bf16.msra.mxu0 0
    %2310 = vmatprep.subr.bf16.mxu0 0
    %2311 = vmatpush1.bf16.msra.mxu0 0
    %2312 = vmatprep.subr.bf16.mxu0 0
    %2313 = vmatpush1.bf16.msra.mxu0 0
    %2314 = vmatprep.subr.bf16.mxu0 0
    %2315 = vmatpush1.bf16.msra.mxu0 0
    %2316 = vmatprep.subr.bf16.mxu0 0
    %2317 = vmatpush1.bf16.msra.mxu0 0
    %2318 = vmatprep.subr.bf16.mxu0 0
    %2319 = vmatpush1.bf16.msra.mxu0 0
    %2320 = vmatprep.subr.bf16.mxu0 0
    %2321 = vmatpush1.bf16.msra.mxu0 0
    %2322 = vmatprep.subr.bf16.mxu0 0
    %2323 = vmatpush1.bf16.msra.mxu0 0
    %2324 = vmatprep.subr.bf16.mxu0 0
    %2325 = vmatpush1.bf16.msra.mxu0 0
    %2326 = vmatprep.subr.bf16.mxu0 0
    %2327 = vmatpush1.bf16.msra.mxu0 0
    %2328 = vmatprep.mubr.bf16.mxu0 0
    %2329 = vmatmul.mubr.bf16.gmra.mrb[0].mxu0 %v2294
    %v2330 = vpop.f32.mrb[0].mxu0
    %v2331 = vadd.f32 %v2273, %v2330
    %v2332 = vpop.f32.mrb[0].mxu0
    %v2333 = vpop.f32.mrb[0].mxu0
    %v2334 = vadd.f32 %v2273, %v2333
    %v2335 = vpop.f32.mrb[0].mxu0
    %2336 = vdwg.mxu0
    %v2337 = vld [vmem:[%s0] sm:$0xff]
    %v2338 = vld [vmem:[%s0 + $0x8] sm:$0xff]
    %v2339 = vadd.f32 %v2331, %v2337
    %v2340 = vadd.f32 %v2334, %v2338
    %2341 = vst [vmem:[#allocation4] sm:$0xff] %v2339
    %2342 = vst [vmem:[#allocation4 + $0x8] sm:$0xff] %v2340
    // Predicated region
    $region34: #{tpu_custom_call.1} parent=1 // pred_check
      _
    $region35: #{tpu_custom_call.1} parent=1 // pred_check_branch
      %2344 = sbr.rel (0) target = $region37
    $region36: #{tpu_custom_call.1} parent=1 // pred_region
      %s2346 = ssub.s32 256, 256
      %2347 = vsyncadd [#allocation5], %s2346
      %s2348 = sshll.u32 [#allocation4], 4
      %s2349 = int_to_ptr.vmem [resolvable:$true] %s2348
      %2354 = dma.vmem_to_hbm [thread:$0]  %s2349, 256, %s8, [#allocation5], 128, 128, 8
    $region37: #{tpu_custom_call.1} parent=1 // pred_fallthru
      _
    // Predicated region
    $region38: #{tpu_custom_call.1} parent=1 // pred_check
      _
    $region39: #{tpu_custom_call.1} parent=1 // pred_check_branch
      %2356 = sbr.rel (0) target = $region41
    $region40: #{tpu_custom_call.1} parent=1 // pred_region
      %2357 = dma.done [#allocation5], 256
    $region41: #{tpu_custom_call.1} parent=1 // pred_fallthru
      _
    %2358 = vsyncpa [#allocation5], 1

</llo_original>
